<compile_context>
chip_gen: v6e
topology: v6e:2x2x1
jax: 0.10.0
libtpu: 0.0.40
codegen_flags: <defaults>
</compile_context>

<pallas_src>
import functools

import jax
import jax.numpy as jnp
import numpy as np
from jax.experimental import pallas as pl
from jax.experimental.pallas import tpu as pltpu


def _round_up(x, m):
    return (x + m - 1) // m * m


# PyTorch packs LSTM gate row-blocks as (i, f, g, o); we re-pack columns to
# (i, f, o, g) so one sigmoid covers the first three gate blocks, tanh the last.
_GATE_ORDER = (0, 1, 3, 2)   # slot -> torch gate index


def _pack_gate_cols(w, H, Hp):
    """w: (4H, K) torch layout -> (K, 4*Hp), gate blocks (i,f,o,g), padded to Hp."""
    K = w.shape[1]
    out = jnp.zeros((K, 4 * Hp), w.dtype)
    for slot, gate in enumerate(_GATE_ORDER):
        out = out.at[:, slot * Hp:slot * Hp + H].set(w[gate * H:(gate + 1) * H, :].T)
    return out


def _pack_gate_bias(b, H, Hp):
    out = jnp.zeros((4 * Hp,), b.dtype)
    for slot, gate in enumerate(_GATE_ORDER):
        out = out.at[slot * Hp:slot * Hp + H].set(b[gate * H:(gate + 1) * H])
    return out


def _lstm_recurrence_kernel(gx_ref, whh_ref, h_out_ref, h_sc, c_sc):
    """One (batch-block, time-block) grid step of the LSTM recurrence.

    gx_ref:    (T_BLK, B_BLK, 4*Hp)  precomputed x_t @ W_ih^T + b, gates (i,f,o,g)
    whh_ref:   (Hp, 4*Hp)            W_hh^T, gate-packed, zero-padded
    h_out_ref: (T_BLK, B_BLK, Hp)    h_t outputs
    h_sc/c_sc: (B_BLK, Hp)           carries, persistent across the time grid axis
    """
    @pl.when(pl.program_id(1) == 0)   # start of the sequence for this batch block
    def _init():
        h_sc[...] = jnp.zeros_like(h_sc)
        c_sc[...] = jnp.zeros_like(c_sc)

    hp = h_sc.shape[-1]
    t_blk = gx_ref.shape[0]
    whh = whh_ref[...]                # resident weight, loaded once per grid step

    def step(tau, carry):
        h, c = carry
        gates = gx_ref[tau] + jnp.dot(h, whh, preferred_element_type=jnp.float32)
        sig = jax.nn.sigmoid(gates[:, :3 * hp])        # fused sigmoid over (i,f,o)
        i_g = sig[:, 0 * hp:1 * hp]
        f_g = sig[:, 1 * hp:2 * hp]
        o_g = sig[:, 2 * hp:3 * hp]
        g_g = jnp.tanh(gates[:, 3 * hp:4 * hp])
        c = f_g * c + i_g * g_g
        h = o_g * jnp.tanh(c)
        h_out_ref[tau] = h
        return h, c

    h, c = jax.lax.fori_loop(0, t_blk, step, (h_sc[...], c_sc[...]), unroll=True)
    h_sc[...] = h
    c_sc[...] = c


@functools.partial(jax.jit, static_argnames=("t_blk",))
def lstm_forward(x_btd, w_ih, w_hh, b_ih, b_hh, w_fc, b_fc, *, t_blk=16):
    """x_btd: (B, T, D_in) batch-first, like nn.LSTM(batch_first=True) + Linear."""
    B, T, D = x_btd.shape
    H = w_hh.shape[1]
    O = w_fc.shape[0]
    f32 = jnp.float32

    Hp = _round_up(H, 128)            # lane-aligned gate blocks (handles H=300 -> 384)
    Bp = _round_up(B, 8)              # sublane-aligned batch
    t_blk = min(t_blk, T)
    Tp = _round_up(T, t_blk)

    # ---- weight prep: gate re-pack (i,f,o,g) + zero pad to lane boundaries ----
    wih_p = _pack_gate_cols(w_ih.astype(f32), H, Hp)                     # (D, 4Hp)
    whh_p = jnp.zeros((Hp, 4 * Hp), f32).at[:H, :].set(
        _pack_gate_cols(w_hh.astype(f32), H, Hp))                        # (Hp, 4Hp)
    b_p = _pack_gate_bias((b_ih + b_hh).astype(f32), H, Hp)              # (4Hp,)

    # ---- hoisted input projection: one big MXU matmul, emitted time-major ----
    x_p = jnp.pad(x_btd.astype(f32), ((0, Bp - B), (0, Tp - T), (0, 0)))
    gx = jnp.einsum("btd,dg->tbg", x_p, wih_p,
                    preferred_element_type=f32) + b_p                    # (Tp, Bp, 4Hp)

    # ---- Pallas recurrence -----------------------------------------------------
    # Two batch blocks (marked "parallel") let v7x's two TensorCores split the
    # batch when B >= 16; on v5e/v6e (one TC) this degenerates to a single block.
    b_blk = Bp // 2 if (Bp >= 16 and Bp % 16 == 0) else Bp
    n_b, n_t = Bp // b_blk, Tp // t_blk

    h_seq = pl.pallas_call(
        _lstm_recurrence_kernel,
        out_shape=jax.ShapeDtypeStruct((Tp, Bp, Hp), f32),
        grid_spec=pltpu.PrefetchScalarGridSpec(
            num_scalar_prefetch=0,
            grid=(n_b, n_t),
            in_specs=[
                pl.BlockSpec((t_blk, b_blk, 4 * Hp), lambda b, t: (t, b, 0)),  # gates_x
                pl.BlockSpec((Hp, 4 * Hp), lambda b, t: (0, 0)),               # W_hh^T
            ],
            out_specs=pl.BlockSpec((t_blk, b_blk, Hp), lambda b, t: (t, b, 0)),
            scratch_shapes=[
                pltpu.VMEM((b_blk, Hp), f32),   # h carry
                pltpu.VMEM((b_blk, Hp), f32),   # c carry
            ],
        ),
        compiler_params=pltpu.CompilerParams(
            dimension_semantics=("parallel", "arbitrary"),
        ),
    )(gx, whh_p)

    # ---- hoisted fc head: one big MXU matmul, batch-first output directly ----
    h_real = h_seq[:T, :B, :H]
    logits = jnp.einsum("tbh,oh->bto", h_real, w_fc.astype(f32),
                        preferred_element_type=f32) + b_fc.astype(f32)   # (B, T, O)
    return logits


def _reference_lstm(x_btd, w_ih, w_hh, b_ih, b_hh, w_fc, b_fc):
    """Pure-JAX reference reproducing torch.nn.LSTM(batch_first=True) + Linear."""
    B, T, D = x_btd.shape
    H = w_hh.shape[1]

    def step(carry, x_t):
        h, c = carry
        gates = x_t @ w_ih.T + b_ih + h @ w_hh.T + b_hh
        i, f, g, o = jnp.split(gates, 4, axis=-1)
        c = jax.nn.sigmoid(f) * c + jax.nn.sigmoid(i) * jnp.tanh(g)
        h = jax.nn.sigmoid(o) * jnp.tanh(c)
        return (h, c), h

    h0 = jnp.zeros((B, H), jnp.float32)
    c0 = jnp.zeros((B, H), jnp.float32)
    _, hs = jax.lax.scan(step, (h0, c0), jnp.transpose(x_btd, (1, 0, 2)))
    hs = jnp.transpose(hs, (1, 0, 2))               # (B, T, H)
    return hs @ w_fc.T + b_fc


if __name__ == "__main__":
    # Small shapes consistent with the module (real module: D=100, H=300, O=vocab).
    # Chosen to exercise every padding path: B->8, H->128 lanes, T->time blocks.
    B, T, D, H, O = 6, 20, 40, 96, 150

    key = jax.random.PRNGKey(0)
    ks = jax.random.split(key, 7)
    scale = 1.0 / np.sqrt(H)
    w_ih = jax.random.uniform(ks[0], (4 * H, D), jnp.float32, -scale, scale)
    w_hh = jax.random.uniform(ks[1], (4 * H, H), jnp.float32, -scale, scale)
    b_ih = jax.random.uniform(ks[2], (4 * H,), jnp.float32, -scale, scale)
    b_hh = jax.random.uniform(ks[3], (4 * H,), jnp.float32, -scale, scale)
    w_fc = jax.random.uniform(ks[4], (O, H), jnp.float32, -scale, scale)
    b_fc = jax.random.uniform(ks[5], (O,), jnp.float32, -scale, scale)
    x = jax.random.normal(ks[6], (B, T, D), jnp.float32)

    out = jax.block_until_ready(
        lstm_forward(x, w_ih, w_hh, b_ih, b_hh, w_fc, b_fc, t_blk=8))
    ref = jax.block_until_ready(
        _reference_lstm(x, w_ih, w_hh, b_ih, b_hh, w_fc, b_fc))

    assert out.shape == (B, T, O), out.shape
    np.testing.assert_allclose(np.asarray(out), np.asarray(ref),
                               rtol=1e-4, atol=1e-4)
    print("KERNEL_OK")
</pallas_src>

<mosaic_0001>
module attributes {stable_mosaic.version = 11 : i64} {
  func.func @_lstm_recurrence_kernel(%arg0: i32, %arg1: i32, %arg2: memref<8x8x512xf32, #tpu.memory_space<vmem>>, %arg3: memref<128x512xf32, #tpu.memory_space<vmem>>, %arg4: memref<8x8x128xf32, #tpu.memory_space<vmem>>, %arg5: memref<8x128xf32, #tpu.memory_space<vmem>>, %arg6: memref<8x128xf32, #tpu.memory_space<vmem>>) attributes {dimension_semantics = [#tpu.dimension_semantics<parallel>, #tpu.dimension_semantics<arbitrary>], iteration_bounds = array<i64: 1, 3>, scalar_prefetch = 0 : i64, scratch_operands = 2 : i64, tpu.core_type = #tpu.core_type<tc>, window_params = [{transform_indices = @transform_0, window_bounds = array<i64: 8, 8, 512>}, {pipeline_mode = #tpu.pipeline_mode<synchronous>, transform_indices = @transform_1, window_bounds = array<i64: 128, 512>}, {transform_indices = @transform_2, window_bounds = array<i64: 8, 8, 128>}]} {
    %c0_i32 = arith.constant 0 : i32
    %0 = arith.cmpi eq, %arg1, %c0_i32 : i32
    %1 = arith.extui %0 : i1 to i32
    %c0_i32_0 = arith.constant 0 : i32
    %2 = arith.cmpi ne, %1, %c0_i32_0 : i32
    scf.if %2 {
      %cst_58 = arith.constant 0.000000e+00 : f32
      %208 = vector.broadcast %cst_58 : f32 to vector<8x128xf32>
      %c0_59 = arith.constant 0 : index
      %c0_60 = arith.constant 0 : index
      %209 = vector.load %arg5[%c0_59, %c0_60] : memref<8x128xf32, #tpu.memory_space<vmem>>, vector<8x128xf32>
      tpu.vector_store %arg5[%c0_59, %c0_60], %208 {strides = array<i32>} : memref<8x128xf32, #tpu.memory_space<vmem>>, vector<8x128xf32>,
      %cst_61 = arith.constant 0.000000e+00 : f32
      %210 = vector.broadcast %cst_61 : f32 to vector<8x128xf32>
      %c0_62 = arith.constant 0 : index
      %c0_63 = arith.constant 0 : index
      %211 = vector.load %arg6[%c0_62, %c0_63] : memref<8x128xf32, #tpu.memory_space<vmem>>, vector<8x128xf32>
      tpu.vector_store %arg6[%c0_62, %c0_63], %210 {strides = array<i32>} : memref<8x128xf32, #tpu.memory_space<vmem>>, vector<8x128xf32>,
    } else {
    }
    %c0 = arith.constant 0 : index
    %c0_1 = arith.constant 0 : index
    %3 = vector.load %arg3[%c0, %c0_1] : memref<128x512xf32, #tpu.memory_space<vmem>>, vector<128x512xf32>
    %c0_2 = arith.constant 0 : index
    %c0_3 = arith.constant 0 : index
    %4 = vector.load %arg5[%c0_2, %c0_3] : memref<8x128xf32, #tpu.memory_space<vmem>>, vector<8x128xf32>
    %c0_4 = arith.constant 0 : index
    %c0_5 = arith.constant 0 : index
    %5 = vector.load %arg6[%c0_4, %c0_5] : memref<8x128xf32, #tpu.memory_space<vmem>>, vector<8x128xf32>
    %c0_i32_6 = arith.constant 0 : i32
    %6 = arith.index_cast %c0_i32_6 : i32 to index
    %c0_7 = arith.constant 0 : index
    %c0_8 = arith.constant 0 : index
    %7 = vector.load %arg2[%6, %c0_7, %c0_8] : memref<8x8x512xf32, #tpu.memory_space<vmem>>, vector<1x8x512xf32>
    %8 = vector.shape_cast %7 : vector<1x8x512xf32> to vector<8x512xf32>
    %cst = arith.constant dense<0.000000e+00> : vector<8x512xf32>
    %9 = tpu.matmul %4, %3, %cst {dimension_numbers = #tpu.dot_dimension_numbers<[1], [0], [0], [1], [0, 0, 1, 1], [], []>} : vector<8x128xf32>, vector<128x512xf32>, vector<8x512xf32> -> vector<8x512xf32>
    %10 = arith.addf %8, %9 : vector<8x512xf32>
    %11 = vector.extract_strided_slice %10 {offsets = [0, 0], sizes = [8, 384], strides = [1, 1]} : vector<8x512xf32> to vector<8x384xf32>
    %12 = arith.negf %11 : vector<8x384xf32>
    %13 = math.exp %12 : vector<8x384xf32>
    %cst_9 = arith.constant 1.000000e+00 : f32
    %14 = vector.broadcast %cst_9 : f32 to vector<8x384xf32>
    %15 = arith.addf %14, %13 : vector<8x384xf32>
    %16 = arith.divf %14, %15 : vector<8x384xf32>
    %17 = vector.extract_strided_slice %16 {offsets = [0, 0], sizes = [8, 128], strides = [1, 1]} : vector<8x384xf32> to vector<8x128xf32>
    %18 = vector.extract_strided_slice %16 {offsets = [0, 128], sizes = [8, 128], strides = [1, 1]} : vector<8x384xf32> to vector<8x128xf32>
    %19 = vector.extract_strided_slice %16 {offsets = [0, 256], sizes = [8, 128], strides = [1, 1]} : vector<8x384xf32> to vector<8x128xf32>
    %20 = vector.extract_strided_slice %10 {offsets = [0, 384], sizes = [8, 128], strides = [1, 1]} : vector<8x512xf32> to vector<8x128xf32>
    %21 = math.tanh %20 : vector<8x128xf32>
    %22 = arith.mulf %18, %5 : vector<8x128xf32>
    %23 = arith.mulf %17, %21 : vector<8x128xf32>
    %24 = arith.addf %22, %23 : vector<8x128xf32>
    %25 = math.tanh %24 : vector<8x128xf32>
    %26 = arith.mulf %19, %25 : vector<8x128xf32>
    %27 = arith.index_cast %c0_i32_6 : i32 to index
    %c0_10 = arith.constant 0 : index
    %c0_11 = arith.constant 0 : index
    %28 = vector.load %arg4[%27, %c0_10, %c0_11] : memref<8x8x128xf32, #tpu.memory_space<vmem>>, vector<1x8x128xf32>
    %29 = vector.shape_cast %28 : vector<1x8x128xf32> to vector<8x128xf32>
    %30 = vector.shape_cast %26 : vector<8x128xf32> to vector<1x8x128xf32>
    tpu.vector_store %arg4[%27, %c0_10, %c0_11], %30 {strides = array<i32>} : memref<8x8x128xf32, #tpu.memory_space<vmem>>, vector<1x8x128xf32>,
    %c1_i32 = arith.constant 1 : i32
    %31 = arith.index_cast %c1_i32 : i32 to index
    %c0_12 = arith.constant 0 : index
    %c0_13 = arith.constant 0 : index
    %32 = vector.load %arg2[%31, %c0_12, %c0_13] : memref<8x8x512xf32, #tpu.memory_space<vmem>>, vector<1x8x512xf32>
    %33 = vector.shape_cast %32 : vector<1x8x512xf32> to vector<8x512xf32>
    %cst_14 = arith.constant dense<0.000000e+00> : vector<8x512xf32>
    %34 = tpu.matmul %26, %3, %cst_14 {dimension_numbers = #tpu.dot_dimension_numbers<[1], [0], [0], [1], [0, 0, 1, 1], [], []>} : vector<8x128xf32>, vector<128x512xf32>, vector<8x512xf32> -> vector<8x512xf32>
    %35 = arith.addf %33, %34 : vector<8x512xf32>
    %36 = vector.extract_strided_slice %35 {offsets = [0, 0], sizes = [8, 384], strides = [1, 1]} : vector<8x512xf32> to vector<8x384xf32>
    %37 = arith.negf %36 : vector<8x384xf32>
    %38 = math.exp %37 : vector<8x384xf32>
    %cst_15 = arith.constant 1.000000e+00 : f32
    %39 = vector.broadcast %cst_15 : f32 to vector<8x384xf32>
    %40 = arith.addf %39, %38 : vector<8x384xf32>
    %41 = arith.divf %39, %40 : vector<8x384xf32>
    %42 = vector.extract_strided_slice %41 {offsets = [0, 0], sizes = [8, 128], strides = [1, 1]} : vector<8x384xf32> to vector<8x128xf32>
    %43 = vector.extract_strided_slice %41 {offsets = [0, 128], sizes = [8, 128], strides = [1, 1]} : vector<8x384xf32> to vector<8x128xf32>
    %44 = vector.extract_strided_slice %41 {offsets = [0, 256], sizes = [8, 128], strides = [1, 1]} : vector<8x384xf32> to vector<8x128xf32>
    %45 = vector.extract_strided_slice %35 {offsets = [0, 384], sizes = [8, 128], strides = [1, 1]} : vector<8x512xf32> to vector<8x128xf32>
    %46 = math.tanh %45 : vector<8x128xf32>
    %47 = arith.mulf %43, %24 : vector<8x128xf32>
    %48 = arith.mulf %42, %46 : vector<8x128xf32>
    %49 = arith.addf %47, %48 : vector<8x128xf32>
    %50 = math.tanh %49 : vector<8x128xf32>
    %51 = arith.mulf %44, %50 : vector<8x128xf32>
    %52 = arith.index_cast %c1_i32 : i32 to index
    %c0_16 = arith.constant 0 : index
    %c0_17 = arith.constant 0 : index
    %53 = vector.load %arg4[%52, %c0_16, %c0_17] : memref<8x8x128xf32, #tpu.memory_space<vmem>>, vector<1x8x128xf32>
    %54 = vector.shape_cast %53 : vector<1x8x128xf32> to vector<8x128xf32>
    %55 = vector.shape_cast %51 : vector<8x128xf32> to vector<1x8x128xf32>
    tpu.vector_store %arg4[%52, %c0_16, %c0_17], %55 {strides = array<i32>} : memref<8x8x128xf32, #tpu.memory_space<vmem>>, vector<1x8x128xf32>,
    %c2_i32 = arith.constant 2 : i32
    %56 = arith.index_cast %c2_i32 : i32 to index
    %c0_18 = arith.constant 0 : index
    %c0_19 = arith.constant 0 : index
    %57 = vector.load %arg2[%56, %c0_18, %c0_19] : memref<8x8x512xf32, #tpu.memory_space<vmem>>, vector<1x8x512xf32>
    %58 = vector.shape_cast %57 : vector<1x8x512xf32> to vector<8x512xf32>
    %cst_20 = arith.constant dense<0.000000e+00> : vector<8x512xf32>
    %59 = tpu.matmul %51, %3, %cst_20 {dimension_numbers = #tpu.dot_dimension_numbers<[1], [0], [0], [1], [0, 0, 1, 1], [], []>} : vector<8x128xf32>, vector<128x512xf32>, vector<8x512xf32> -> vector<8x512xf32>
    %60 = arith.addf %58, %59 : vector<8x512xf32>
    %61 = vector.extract_strided_slice %60 {offsets = [0, 0], sizes = [8, 384], strides = [1, 1]} : vector<8x512xf32> to vector<8x384xf32>
    %62 = arith.negf %61 : vector<8x384xf32>
    %63 = math.exp %62 : vector<8x384xf32>
    %cst_21 = arith.constant 1.000000e+00 : f32
    %64 = vector.broadcast %cst_21 : f32 to vector<8x384xf32>
    %65 = arith.addf %64, %63 : vector<8x384xf32>
    %66 = arith.divf %64, %65 : vector<8x384xf32>
    %67 = vector.extract_strided_slice %66 {offsets = [0, 0], sizes = [8, 128], strides = [1, 1]} : vector<8x384xf32> to vector<8x128xf32>
    %68 = vector.extract_strided_slice %66 {offsets = [0, 128], sizes = [8, 128], strides = [1, 1]} : vector<8x384xf32> to vector<8x128xf32>
    %69 = vector.extract_strided_slice %66 {offsets = [0, 256], sizes = [8, 128], strides = [1, 1]} : vector<8x384xf32> to vector<8x128xf32>
    %70 = vector.extract_strided_slice %60 {offsets = [0, 384], sizes = [8, 128], strides = [1, 1]} : vector<8x512xf32> to vector<8x128xf32>
    %71 = math.tanh %70 : vector<8x128xf32>
    %72 = arith.mulf %68, %49 : vector<8x128xf32>
    %73 = arith.mulf %67, %71 : vector<8x128xf32>
    %74 = arith.addf %72, %73 : vector<8x128xf32>
    %75 = math.tanh %74 : vector<8x128xf32>
    %76 = arith.mulf %69, %75 : vector<8x128xf32>
    %77 = arith.index_cast %c2_i32 : i32 to index
    %c0_22 = arith.constant 0 : index
    %c0_23 = arith.constant 0 : index
    %78 = vector.load %arg4[%77, %c0_22, %c0_23] : memref<8x8x128xf32, #tpu.memory_space<vmem>>, vector<1x8x128xf32>
    %79 = vector.shape_cast %78 : vector<1x8x128xf32> to vector<8x128xf32>
    %80 = vector.shape_cast %76 : vector<8x128xf32> to vector<1x8x128xf32>
    tpu.vector_store %arg4[%77, %c0_22, %c0_23], %80 {strides = array<i32>} : memref<8x8x128xf32, #tpu.memory_space<vmem>>, vector<1x8x128xf32>,
    %c3_i32 = arith.constant 3 : i32
    %81 = arith.index_cast %c3_i32 : i32 to index
    %c0_24 = arith.constant 0 : index
    %c0_25 = arith.constant 0 : index
    %82 = vector.load %arg2[%81, %c0_24, %c0_25] : memref<8x8x512xf32, #tpu.memory_space<vmem>>, vector<1x8x512xf32>
    %83 = vector.shape_cast %82 : vector<1x8x512xf32> to vector<8x512xf32>
    %cst_26 = arith.constant dense<0.000000e+00> : vector<8x512xf32>
    %84 = tpu.matmul %76, %3, %cst_26 {dimension_numbers = #tpu.dot_dimension_numbers<[1], [0], [0], [1], [0, 0, 1, 1], [], []>} : vector<8x128xf32>, vector<128x512xf32>, vector<8x512xf32> -> vector<8x512xf32>
    %85 = arith.addf %83, %84 : vector<8x512xf32>
    %86 = vector.extract_strided_slice %85 {offsets = [0, 0], sizes = [8, 384], strides = [1, 1]} : vector<8x512xf32> to vector<8x384xf32>
    %87 = arith.negf %86 : vector<8x384xf32>
    %88 = math.exp %87 : vector<8x384xf32>
    %cst_27 = arith.constant 1.000000e+00 : f32
    %89 = vector.broadcast %cst_27 : f32 to vector<8x384xf32>
    %90 = arith.addf %89, %88 : vector<8x384xf32>
    %91 = arith.divf %89, %90 : vector<8x384xf32>
    %92 = vector.extract_strided_slice %91 {offsets = [0, 0], sizes = [8, 128], strides = [1, 1]} : vector<8x384xf32> to vector<8x128xf32>
    %93 = vector.extract_strided_slice %91 {offsets = [0, 128], sizes = [8, 128], strides = [1, 1]} : vector<8x384xf32> to vector<8x128xf32>
    %94 = vector.extract_strided_slice %91 {offsets = [0, 256], sizes = [8, 128], strides = [1, 1]} : vector<8x384xf32> to vector<8x128xf32>
    %95 = vector.extract_strided_slice %85 {offsets = [0, 384], sizes = [8, 128], strides = [1, 1]} : vector<8x512xf32> to vector<8x128xf32>
    %96 = math.tanh %95 : vector<8x128xf32>
    %97 = arith.mulf %93, %74 : vector<8x128xf32>
    %98 = arith.mulf %92, %96 : vector<8x128xf32>
    %99 = arith.addf %97, %98 : vector<8x128xf32>
    %100 = math.tanh %99 : vector<8x128xf32>
    %101 = arith.mulf %94, %100 : vector<8x128xf32>
    %102 = arith.index_cast %c3_i32 : i32 to index
    %c0_28 = arith.constant 0 : index
    %c0_29 = arith.constant 0 : index
    %103 = vector.load %arg4[%102, %c0_28, %c0_29] : memref<8x8x128xf32, #tpu.memory_space<vmem>>, vector<1x8x128xf32>
    %104 = vector.shape_cast %103 : vector<1x8x128xf32> to vector<8x128xf32>
    %105 = vector.shape_cast %101 : vector<8x128xf32> to vector<1x8x128xf32>
    tpu.vector_store %arg4[%102, %c0_28, %c0_29], %105 {strides = array<i32>} : memref<8x8x128xf32, #tpu.memory_space<vmem>>, vector<1x8x128xf32>,
    %c4_i32 = arith.constant 4 : i32
    %106 = arith.index_cast %c4_i32 : i32 to index
    %c0_30 = arith.constant 0 : index
    %c0_31 = arith.constant 0 : index
    %107 = vector.load %arg2[%106, %c0_30, %c0_31] : memref<8x8x512xf32, #tpu.memory_space<vmem>>, vector<1x8x512xf32>
    %108 = vector.shape_cast %107 : vector<1x8x512xf32> to vector<8x512xf32>
    %cst_32 = arith.constant dense<0.000000e+00> : vector<8x512xf32>
    %109 = tpu.matmul %101, %3, %cst_32 {dimension_numbers = #tpu.dot_dimension_numbers<[1], [0], [0], [1], [0, 0, 1, 1], [], []>} : vector<8x128xf32>, vector<128x512xf32>, vector<8x512xf32> -> vector<8x512xf32>
    %110 = arith.addf %108, %109 : vector<8x512xf32>
    %111 = vector.extract_strided_slice %110 {offsets = [0, 0], sizes = [8, 384], strides = [1, 1]} : vector<8x512xf32> to vector<8x384xf32>
    %112 = arith.negf %111 : vector<8x384xf32>
    %113 = math.exp %112 : vector<8x384xf32>
    %cst_33 = arith.constant 1.000000e+00 : f32
    %114 = vector.broadcast %cst_33 : f32 to vector<8x384xf32>
    %115 = arith.addf %114, %113 : vector<8x384xf32>
    %116 = arith.divf %114, %115 : vector<8x384xf32>
    %117 = vector.extract_strided_slice %116 {offsets = [0, 0], sizes = [8, 128], strides = [1, 1]} : vector<8x384xf32> to vector<8x128xf32>
    %118 = vector.extract_strided_slice %116 {offsets = [0, 128], sizes = [8, 128], strides = [1, 1]} : vector<8x384xf32> to vector<8x128xf32>
    %119 = vector.extract_strided_slice %116 {offsets = [0, 256], sizes = [8, 128], strides = [1, 1]} : vector<8x384xf32> to vector<8x128xf32>
    %120 = vector.extract_strided_slice %110 {offsets = [0, 384], sizes = [8, 128], strides = [1, 1]} : vector<8x512xf32> to vector<8x128xf32>
    %121 = math.tanh %120 : vector<8x128xf32>
    %122 = arith.mulf %118, %99 : vector<8x128xf32>
    %123 = arith.mulf %117, %121 : vector<8x128xf32>
    %124 = arith.addf %122, %123 : vector<8x128xf32>
    %125 = math.tanh %124 : vector<8x128xf32>
    %126 = arith.mulf %119, %125 : vector<8x128xf32>
    %127 = arith.index_cast %c4_i32 : i32 to index
    %c0_34 = arith.constant 0 : index
    %c0_35 = arith.constant 0 : index
    %128 = vector.load %arg4[%127, %c0_34, %c0_35] : memref<8x8x128xf32, #tpu.memory_space<vmem>>, vector<1x8x128xf32>
    %129 = vector.shape_cast %128 : vector<1x8x128xf32> to vector<8x128xf32>
    %130 = vector.shape_cast %126 : vector<8x128xf32> to vector<1x8x128xf32>
    tpu.vector_store %arg4[%127, %c0_34, %c0_35], %130 {strides = array<i32>} : memref<8x8x128xf32, #tpu.memory_space<vmem>>, vector<1x8x128xf32>,
    %c5_i32 = arith.constant 5 : i32
    %131 = arith.index_cast %c5_i32 : i32 to index
    %c0_36 = arith.constant 0 : index
    %c0_37 = arith.constant 0 : index
    %132 = vector.load %arg2[%131, %c0_36, %c0_37] : memref<8x8x512xf32, #tpu.memory_space<vmem>>, vector<1x8x512xf32>
    %133 = vector.shape_cast %132 : vector<1x8x512xf32> to vector<8x512xf32>
    %cst_38 = arith.constant dense<0.000000e+00> : vector<8x512xf32>
    %134 = tpu.matmul %126, %3, %cst_38 {dimension_numbers = #tpu.dot_dimension_numbers<[1], [0], [0], [1], [0, 0, 1, 1], [], []>} : vector<8x128xf32>, vector<128x512xf32>, vector<8x512xf32> -> vector<8x512xf32>
    %135 = arith.addf %133, %134 : vector<8x512xf32>
    %136 = vector.extract_strided_slice %135 {offsets = [0, 0], sizes = [8, 384], strides = [1, 1]} : vector<8x512xf32> to vector<8x384xf32>
    %137 = arith.negf %136 : vector<8x384xf32>
    %138 = math.exp %137 : vector<8x384xf32>
    %cst_39 = arith.constant 1.000000e+00 : f32
    %139 = vector.broadcast %cst_39 : f32 to vector<8x384xf32>
    %140 = arith.addf %139, %138 : vector<8x384xf32>
    %141 = arith.divf %139, %140 : vector<8x384xf32>
    %142 = vector.extract_strided_slice %141 {offsets = [0, 0], sizes = [8, 128], strides = [1, 1]} : vector<8x384xf32> to vector<8x128xf32>
    %143 = vector.extract_strided_slice %141 {offsets = [0, 128], sizes = [8, 128], strides = [1, 1]} : vector<8x384xf32> to vector<8x128xf32>
    %144 = vector.extract_strided_slice %141 {offsets = [0, 256], sizes = [8, 128], strides = [1, 1]} : vector<8x384xf32> to vector<8x128xf32>
    %145 = vector.extract_strided_slice %135 {offsets = [0, 384], sizes = [8, 128], strides = [1, 1]} : vector<8x512xf32> to vector<8x128xf32>
    %146 = math.tanh %145 : vector<8x128xf32>
    %147 = arith.mulf %143, %124 : vector<8x128xf32>
    %148 = arith.mulf %142, %146 : vector<8x128xf32>
    %149 = arith.addf %147, %148 : vector<8x128xf32>
    %150 = math.tanh %149 : vector<8x128xf32>
    %151 = arith.mulf %144, %150 : vector<8x128xf32>
    %152 = arith.index_cast %c5_i32 : i32 to index
    %c0_40 = arith.constant 0 : index
    %c0_41 = arith.constant 0 : index
    %153 = vector.load %arg4[%152, %c0_40, %c0_41] : memref<8x8x128xf32, #tpu.memory_space<vmem>>, vector<1x8x128xf32>
    %154 = vector.shape_cast %153 : vector<1x8x128xf32> to vector<8x128xf32>
    %155 = vector.shape_cast %151 : vector<8x128xf32> to vector<1x8x128xf32>
    tpu.vector_store %arg4[%152, %c0_40, %c0_41], %155 {strides = array<i32>} : memref<8x8x128xf32, #tpu.memory_space<vmem>>, vector<1x8x128xf32>,
    %c6_i32 = arith.constant 6 : i32
    %156 = arith.index_cast %c6_i32 : i32 to index
    %c0_42 = arith.constant 0 : index
    %c0_43 = arith.constant 0 : index
    %157 = vector.load %arg2[%156, %c0_42, %c0_43] : memref<8x8x512xf32, #tpu.memory_space<vmem>>, vector<1x8x512xf32>
    %158 = vector.shape_cast %157 : vector<1x8x512xf32> to vector<8x512xf32>
    %cst_44 = arith.constant dense<0.000000e+00> : vector<8x512xf32>
    %159 = tpu.matmul %151, %3, %cst_44 {dimension_numbers = #tpu.dot_dimension_numbers<[1], [0], [0], [1], [0, 0, 1, 1], [], []>} : vector<8x128xf32>, vector<128x512xf32>, vector<8x512xf32> -> vector<8x512xf32>
    %160 = arith.addf %158, %159 : vector<8x512xf32>
    %161 = vector.extract_strided_slice %160 {offsets = [0, 0], sizes = [8, 384], strides = [1, 1]} : vector<8x512xf32> to vector<8x384xf32>
    %162 = arith.negf %161 : vector<8x384xf32>
    %163 = math.exp %162 : vector<8x384xf32>
    %cst_45 = arith.constant 1.000000e+00 : f32
    %164 = vector.broadcast %cst_45 : f32 to vector<8x384xf32>
    %165 = arith.addf %164, %163 : vector<8x384xf32>
    %166 = arith.divf %164, %165 : vector<8x384xf32>
    %167 = vector.extract_strided_slice %166 {offsets = [0, 0], sizes = [8, 128], strides = [1, 1]} : vector<8x384xf32> to vector<8x128xf32>
    %168 = vector.extract_strided_slice %166 {offsets = [0, 128], sizes = [8, 128], strides = [1, 1]} : vector<8x384xf32> to vector<8x128xf32>
    %169 = vector.extract_strided_slice %166 {offsets = [0, 256], sizes = [8, 128], strides = [1, 1]} : vector<8x384xf32> to vector<8x128xf32>
    %170 = vector.extract_strided_slice %160 {offsets = [0, 384], sizes = [8, 128], strides = [1, 1]} : vector<8x512xf32> to vector<8x128xf32>
    %171 = math.tanh %170 : vector<8x128xf32>
    %172 = arith.mulf %168, %149 : vector<8x128xf32>
    %173 = arith.mulf %167, %171 : vector<8x128xf32>
    %174 = arith.addf %172, %173 : vector<8x128xf32>
    %175 = math.tanh %174 : vector<8x128xf32>
    %176 = arith.mulf %169, %175 : vector<8x128xf32>
    %177 = arith.index_cast %c6_i32 : i32 to index
    %c0_46 = arith.constant 0 : index
    %c0_47 = arith.constant 0 : index
    %178 = vector.load %arg4[%177, %c0_46, %c0_47] : memref<8x8x128xf32, #tpu.memory_space<vmem>>, vector<1x8x128xf32>
    %179 = vector.shape_cast %178 : vector<1x8x128xf32> to vector<8x128xf32>
    %180 = vector.shape_cast %176 : vector<8x128xf32> to vector<1x8x128xf32>
    tpu.vector_store %arg4[%177, %c0_46, %c0_47], %180 {strides = array<i32>} : memref<8x8x128xf32, #tpu.memory_space<vmem>>, vector<1x8x128xf32>,
    %c7_i32 = arith.constant 7 : i32
    %181 = arith.index_cast %c7_i32 : i32 to index
    %c0_48 = arith.constant 0 : index
    %c0_49 = arith.constant 0 : index
    %182 = vector.load %arg2[%181, %c0_48, %c0_49] : memref<8x8x512xf32, #tpu.memory_space<vmem>>, vector<1x8x512xf32>
    %183 = vector.shape_cast %182 : vector<1x8x512xf32> to vector<8x512xf32>
    %cst_50 = arith.constant dense<0.000000e+00> : vector<8x512xf32>
    %184 = tpu.matmul %176, %3, %cst_50 {dimension_numbers = #tpu.dot_dimension_numbers<[1], [0], [0], [1], [0, 0, 1, 1], [], []>} : vector<8x128xf32>, vector<128x512xf32>, vector<8x512xf32> -> vector<8x512xf32>
    %185 = arith.addf %183, %184 : vector<8x512xf32>
    %186 = vector.extract_strided_slice %185 {offsets = [0, 0], sizes = [8, 384], strides = [1, 1]} : vector<8x512xf32> to vector<8x384xf32>
    %187 = arith.negf %186 : vector<8x384xf32>
    %188 = math.exp %187 : vector<8x384xf32>
    %cst_51 = arith.constant 1.000000e+00 : f32
    %189 = vector.broadcast %cst_51 : f32 to vector<8x384xf32>
    %190 = arith.addf %189, %188 : vector<8x384xf32>
    %191 = arith.divf %189, %190 : vector<8x384xf32>
    %192 = vector.extract_strided_slice %191 {offsets = [0, 0], sizes = [8, 128], strides = [1, 1]} : vector<8x384xf32> to vector<8x128xf32>
    %193 = vector.extract_strided_slice %191 {offsets = [0, 128], sizes = [8, 128], strides = [1, 1]} : vector<8x384xf32> to vector<8x128xf32>
    %194 = vector.extract_strided_slice %191 {offsets = [0, 256], sizes = [8, 128], strides = [1, 1]} : vector<8x384xf32> to vector<8x128xf32>
    %195 = vector.extract_strided_slice %185 {offsets = [0, 384], sizes = [8, 128], strides = [1, 1]} : vector<8x512xf32> to vector<8x128xf32>
    %196 = math.tanh %195 : vector<8x128xf32>
    %197 = arith.mulf %193, %174 : vector<8x128xf32>
    %198 = arith.mulf %192, %196 : vector<8x128xf32>
    %199 = arith.addf %197, %198 : vector<8x128xf32>
    %200 = math.tanh %199 : vector<8x128xf32>
    %201 = arith.mulf %194, %200 : vector<8x128xf32>
    %202 = arith.index_cast %c7_i32 : i32 to index
    %c0_52 = arith.constant 0 : index
    %c0_53 = arith.constant 0 : index
    %203 = vector.load %arg4[%202, %c0_52, %c0_53] : memref<8x8x128xf32, #tpu.memory_space<vmem>>, vector<1x8x128xf32>
    %204 = vector.shape_cast %203 : vector<1x8x128xf32> to vector<8x128xf32>
    %205 = vector.shape_cast %201 : vector<8x128xf32> to vector<1x8x128xf32>
    tpu.vector_store %arg4[%202, %c0_52, %c0_53], %205 {strides = array<i32>} : memref<8x8x128xf32, #tpu.memory_space<vmem>>, vector<1x8x128xf32>,
    %c8_i32 = arith.constant 8 : i32
    %c0_54 = arith.constant 0 : index
    %c0_55 = arith.constant 0 : index
    %206 = vector.load %arg5[%c0_54, %c0_55] : memref<8x128xf32, #tpu.memory_space<vmem>>, vector<8x128xf32>
    tpu.vector_store %arg5[%c0_54, %c0_55], %201 {strides = array<i32>} : memref<8x128xf32, #tpu.memory_space<vmem>>, vector<8x128xf32>,
    %c0_56 = arith.constant 0 : index
    %c0_57 = arith.constant 0 : index
    %207 = vector.load %arg6[%c0_56, %c0_57] : memref<8x128xf32, #tpu.memory_space<vmem>>, vector<8x128xf32>
    tpu.vector_store %arg6[%c0_56, %c0_57], %199 {strides = array<i32>} : memref<8x128xf32, #tpu.memory_space<vmem>>, vector<8x128xf32>,
    return
  }
  func.func @transform_0(%arg0: i32, %arg1: i32) -> (i32, i32, i32) {
    %c0_i32 = arith.constant 0 : i32
    %c0_i32_0 = arith.constant 0 : i32
    return %arg1, %arg0, %c0_i32 : i32, i32, i32
  }
  func.func @transform_1(%arg0: i32, %arg1: i32) -> (i32, i32) {
    %c0_i32 = arith.constant 0 : i32
    %c0_i32_0 = arith.constant 0 : i32
    %c0_i32_1 = arith.constant 0 : i32
    return %c0_i32, %c0_i32_0 : i32, i32
  }
  func.func @transform_2(%arg0: i32, %arg1: i32) -> (i32, i32, i32) {
    %c0_i32 = arith.constant 0 : i32
    %c0_i32_0 = arith.constant 0 : i32
    return %arg1, %arg0, %c0_i32 : i32, i32, i32
  }
}

</mosaic_0001>

<llo_original>
// kernel: lstm_forward.1
$region0: #{lstm_forward.1}
  #allocation0 [shape = 'u32[]', space=smem, size = 0x4, offset = 0x4, fixed_abs, tag = 'smem constant byte address 0x4 - core index']
  #allocation1 [shape = 'u32[144,128]{1,0:T(1,128)}', space=vmem, size = 0x12000, scoped, tag = 'internal scratch']
  #allocation2 [shape = 'f32[8,128]{1,0:T(8,128)}', space=vmem, size = 0x1000, scoped, tag = 'scratch operand']
  #allocation3 [shape = 'f32[8,128]{1,0:T(8,128)}', space=vmem, size = 0x1000, scoped, tag = 'scratch operand']
  %s0 = inlined_call_operand.vmem [shape: f32[24,8,512], index: 0, kind: input, shape index: {}]
  %s1 = inlined_call_operand.vmem [shape: f32[128,512], index: 1, kind: input, shape index: {}]
  %s2 = inlined_call_operand.vmem [shape: f32[24,8,128], index: 2, kind: output, shape index: {}]
  %s3 = sld [smem:[#allocation0]]
  $region45: #{lstm_forward.1} parent=0
    _
  %s5 = ssub.s32 1, %s3
  %s6 = scalar_select 0, %s5, %s3
  loop: start=0, step=1, limit=5
  $region2: #{lstm_forward.1} parent=0 // loop_pre_header
    _
  $region3: #{lstm_forward.1} parent=0 // loop_header
    %s8 = sphi 0, %s12
    %p9 = scmp.ge.s32.totalorder %s8, 5
    %s15 = sphi 0, %s27
    %s16 = sphi 0, %s23
    %s17 = sphi 0, %s15
    %s18 = sphi 0, %s16
    %s19 = sphi 0, %s17
    %s20 = sphi 0, %s18
    %s32 = sphi 0, %s34
    %s35 = sphi 0, %s32
    %s36 = sphi 0, %s35
    %s52 = sphi 0, %s36
    %s56 = sphi 0, %s56
    %s58 = sphi 0, %s56
    %s59 = sphi 0, %s58
    %s73 = sphi 0, %s59
    %s81 = sphi 0, %s83
    %s84 = sphi 0, %s81
    %s85 = sphi 0, %s84
    %s101 = sphi 0, %s85
  $region4: #{lstm_forward.1} parent=0 // loop_header_branch
    %11 = sbr.rel (%p9) target = $region8
  $region5: #{lstm_forward.1} parent=0 // loop_body
    %s13 = ssub.s32 %s8, 1
    %s14 = ssub.s32 %s8, 2
    %s21 = sadd.s32 1, %s16
    %p22 = scmp.ge.s32.totalorder %s21, 3
    %s23 = scalar_select %p22, 0, %s21
    %s24 = sadd.s32 1, %s15
    %s25 = scalar_select %p22, %s24, %s15
    %p26 = scmp.ge.s32.totalorder %s25, 1
    %s27 = scalar_select %p26, 0, %s25
    %s28 = ssub.s32 %s16, %s23
    %s29 = ssub.s32 %s15, %s27
    %s30 = sor.u32 %s28, %s29
    %p31 = scmp.eq.s32.totalorder %s30, 0
    %s33 = sadd.s32 %s32, 1
    %s34 = scalar_select %p31, %s32, %s33
    %p37 = pneg %p31
    %p38 = scmp.eq.s32.totalorder %s8, 2
    %p39 = por %p37, %p38
    %p40 = scmp.ne.s32.totalorder %s32, %s35
    %p41 = scmp.eq.s32.totalorder %s8, 0
    %p42 = por %p40, %p41
    %p43 = scmp.ne.s32.totalorder %s32, %s35
    %p44 = scmp.eq.s32.totalorder %s13, 2
    %p45 = por %p43, %p44
    %p46 = scmp.ne.s32.totalorder %s35, %s36
    %p47 = scmp.eq.s32.totalorder %s13, 0
    %p48 = por %p46, %p47
    %p49 = scmp.ne.s32.totalorder %s35, %s36
    %p50 = scmp.eq.s32.totalorder %s14, 2
    %p51 = por %p49, %p50
    %p53 = scmp.ne.s32.totalorder %s36, %s52
    %p54 = scmp.eq.s32.totalorder %s14, 0
    %p55 = por %p53, %p54
    %s57 = sadd.s32 %s56, 1
    %p60 = scmp.eq.s32.totalorder %s8, 2
    %p61 = scmp.ne.s32.totalorder %s56, %s58
    %p62 = scmp.eq.s32.totalorder %s8, 0
    %p63 = por %p61, %p62
    %p64 = scmp.ne.s32.totalorder %s56, %s58
    %p65 = scmp.eq.s32.totalorder %s13, 2
    %p66 = por %p64, %p65
    %p67 = scmp.ne.s32.totalorder %s58, %s59
    %p68 = scmp.eq.s32.totalorder %s13, 0
    %p69 = por %p67, %p68
    %p70 = scmp.ne.s32.totalorder %s58, %s59
    %p71 = scmp.eq.s32.totalorder %s14, 2
    %p72 = por %p70, %p71
    %p74 = scmp.ne.s32.totalorder %s59, %s73
    %p75 = scmp.eq.s32.totalorder %s14, 0
    %p76 = por %p74, %p75
    %s77 = ssub.s32 %s16, %s23
    %s78 = ssub.s32 %s15, %s27
    %s79 = sor.u32 %s77, %s78
    %p80 = scmp.eq.s32.totalorder %s79, 0
    %s82 = sadd.s32 %s81, 1
    %s83 = scalar_select %p80, %s81, %s82
    %p86 = pneg %p80
    %p87 = scmp.eq.s32.totalorder %s8, 2
    %p88 = por %p86, %p87
    %p89 = scmp.ne.s32.totalorder %s81, %s84
    %p90 = scmp.eq.s32.totalorder %s8, 0
    %p91 = por %p89, %p90
    %p92 = scmp.ne.s32.totalorder %s81, %s84
    %p93 = scmp.eq.s32.totalorder %s13, 2
    %p94 = por %p92, %p93
    %p95 = scmp.ne.s32.totalorder %s84, %s85
    %p96 = scmp.eq.s32.totalorder %s13, 0
    %p97 = por %p95, %p96
    %p98 = scmp.ne.s32.totalorder %s84, %s85
    %p99 = scmp.eq.s32.totalorder %s14, 2
    %p100 = por %p98, %p99
    %p102 = scmp.ne.s32.totalorder %s85, %s101
    %p103 = scmp.eq.s32.totalorder %s14, 0
    %p104 = por %p102, %p103
    %p105 = scmp.le.s32.totalorder 1, %s8
    %p106 = scmp.lt.s32.totalorder %s8, 4
    %p107 = pnand %p105, %p106
    %p108 = pneg %p107
    // Predicated region
    $region9: #{lstm_forward.1} parent=5 // pred_check
      _
    $region10: #{lstm_forward.1} parent=5 // pred_check_branch
      %110 = sbr.rel (%p107) target = $region12
    $region11: #{lstm_forward.1} parent=5 // pred_region
      %s111 = ssub.s32 %s8, 1
      // Predicated region
      $region13: #{lstm_forward.1} parent=11 // pred_check
        %p112 = pneg %p69
      $region14: #{lstm_forward.1} parent=11 // pred_check_branch
        %114 = sbr.rel (%p112) target = $region16
      $region15: #{lstm_forward.1} parent=11 // pred_region
        _
      $region16: #{lstm_forward.1} parent=11 // pred_fallthru
        _
    $region12: #{lstm_forward.1} parent=5 // pred_fallthru
      _
    %p115 = scmp.lt.s32.totalorder %s8, 3
    // Predicated region
    $region17: #{lstm_forward.1} parent=5 // pred_check
      %p116 = pneg %p115
    $region18: #{lstm_forward.1} parent=5 // pred_check_branch
      %118 = sbr.rel (%p116) target = $region20
    $region19: #{lstm_forward.1} parent=5 // pred_region
      // Predicated region
      $region21: #{lstm_forward.1} parent=19 // pred_check
        %p119 = pneg %p42
      $region22: #{lstm_forward.1} parent=19 // pred_check_branch
        %121 = sbr.rel (%p119) target = $region24
      $region23: #{lstm_forward.1} parent=19 // pred_region
        %s122 = smul.u32 8, %s16
        %p123 = scmp.lt.s32.totalorder %s122, 23
        %s124 = scalar_select %p123, %s122, 23
        %p125 = scmp.lt.s32.totalorder %s15, 0
        %s126 = scalar_select %p125, %s15, 0
        %s127 = smul.addr %s126, 4
        %s128 = smul.addr %s124, 4
        %s129 = sadd.s32 %s127, %s128
        %s130 = smul.addr %s129, 8
        %s131 = scalar_lea.vmem %s0, %s130
        %s132 = smul.u32 8, %s16
      $region24: #{lstm_forward.1} parent=19 // pred_fallthru
        _
    $region20: #{lstm_forward.1} parent=5 // pred_fallthru
      _
    %p133 = scmp.le.s32.totalorder 1, %s8
    %p134 = scmp.lt.s32.totalorder %s8, 4
    %p135 = pnand %p133, %p134
    %p136 = pneg %p135
    // Predicated region
    $region25: #{lstm_forward.1} parent=5 // pred_check
      _
    $region26: #{lstm_forward.1} parent=5 // pred_check_branch
      %138 = sbr.rel (%p135) target = $region28
    $region27: #{lstm_forward.1} parent=5 // pred_region
      %s139 = ssub.s32 %s8, 1
      %s140 = smul.u32 8, %s18
      %p141 = scmp.lt.s32.totalorder %s140, 23
      %s142 = scalar_select %p141, %s140, 23
      %p143 = scmp.lt.s32.totalorder %s17, 0
      %s144 = scalar_select %p143, %s17, 0
      %s145 = smul.addr %s144, 4
      %s146 = smul.addr %s142, 4
      %s147 = sadd.s32 %s145, %s146
      %s148 = smul.addr %s147, 8
      %s149 = scalar_lea.vmem %s0, %s148
      %p150 = pneg %p48
      %p151 = pneg %p45
      %p152 = pneg %p69
      %p153 = pneg %p66
      %p154 = pneg %p97
      %p155 = pneg %p94
      %s156 = smul.u32 8, %s18
      %p157 = scmp.lt.s32.totalorder %s156, 23
      %s158 = scalar_select %p157, %s156, 23
      %p159 = scmp.lt.s32.totalorder %s17, 0
      %s160 = scalar_select %p159, %s17, 0
      %s161 = sadd.s32 %s160, %s158
      %s162 = smul.addr %s161, 8
      %s163 = scalar_lea.vmem %s2, %s162
      %s164 = smul.u32 8, %s18
      %p165 = scmp.lt.s32.totalorder %s164, 23
      %s166 = scalar_select %p165, %s164, 23
      %p167 = scmp.lt.s32.totalorder %s17, 0
      %s168 = scalar_select %p167, %s17, 0
      %s169 = smul.addr %s168, 4
      %s170 = smul.addr %s166, 4
      %s171 = sadd.s32 %s169, %s170
      %s172 = smul.addr %s171, 8
      %s173 = scalar_lea.vmem %s0, %s172
      %s174 = smul.u32 8, %s18
      %s175 = smul.u32 8, %s18
      %p176 = scmp.lt.s32.totalorder %s175, 23
      %s177 = scalar_select %p176, %s175, 23
      %p178 = scmp.lt.s32.totalorder %s17, 0
      %s179 = scalar_select %p178, %s17, 0
      %s180 = sadd.s32 %s179, %s177
      %s181 = smul.addr %s180, 8
      %s182 = scalar_lea.vmem %s2, %s181
      %s183 = smul.u32 8, %s18
      %p184 = scmp.eq.s32.totalorder %s18, 0
      // Predicated region
      $region29: #{lstm_forward.1} parent=27 // pred_check
        %p185 = pneg %p184
      $region30: #{lstm_forward.1} parent=27 // pred_check_branch
        %187 = sbr.rel (%p185) target = $region32
      $region31: #{lstm_forward.1} parent=27 // pred_region
        %188 = vst [vmem:[#allocation2] sm:$0xff] 0.0
        %189 = vst [vmem:[#allocation3] sm:$0xff] 0.0
      $region32: #{lstm_forward.1} parent=27 // pred_fallthru
        _
      %v190 = vld [vmem:[%s1] sm:$0xff]
      %v191 = vld [vmem:[%s1 + $0x8] sm:$0xff]
      %v192 = vld [vmem:[%s1 + $0x10] sm:$0xff]
      %v193 = vld [vmem:[%s1 + $0x18] sm:$0xff]
      %v194 = vld [vmem:[%s1 + $0x20] sm:$0xff]
      %v195 = vld [vmem:[%s1 + $0x28] sm:$0xff]
      %v196 = vld [vmem:[%s1 + $0x30] sm:$0xff]
      %v197 = vld [vmem:[%s1 + $0x38] sm:$0xff]
      %v198 = vld [vmem:[%s1 + $0x40] sm:$0xff]
      %v199 = vld [vmem:[%s1 + $0x48] sm:$0xff]
      %v200 = vld [vmem:[%s1 + $0x50] sm:$0xff]
      %v201 = vld [vmem:[%s1 + $0x58] sm:$0xff]
      %v202 = vld [vmem:[%s1 + $0x60] sm:$0xff]
      %v203 = vld [vmem:[%s1 + $0x68] sm:$0xff]
      %v204 = vld [vmem:[%s1 + $0x70] sm:$0xff]
      %v205 = vld [vmem:[%s1 + $0x78] sm:$0xff]
      %v206 = vld [vmem:[%s1 + $0x80] sm:$0xff]
      %v207 = vld [vmem:[%s1 + $0x88] sm:$0xff]
      %v208 = vld [vmem:[%s1 + $0x90] sm:$0xff]
      %v209 = vld [vmem:[%s1 + $0x98] sm:$0xff]
      %v210 = vld [vmem:[%s1 + $0xa0] sm:$0xff]
      %v211 = vld [vmem:[%s1 + $0xa8] sm:$0xff]
      %v212 = vld [vmem:[%s1 + $0xb0] sm:$0xff]
      %v213 = vld [vmem:[%s1 + $0xb8] sm:$0xff]
      %v214 = vld [vmem:[%s1 + $0xc0] sm:$0xff]
      %v215 = vld [vmem:[%s1 + $0xc8] sm:$0xff]
      %v216 = vld [vmem:[%s1 + $0xd0] sm:$0xff]
      %v217 = vld [vmem:[%s1 + $0xd8] sm:$0xff]
      %v218 = vld [vmem:[%s1 + $0xe0] sm:$0xff]
      %v219 = vld [vmem:[%s1 + $0xe8] sm:$0xff]
      %v220 = vld [vmem:[%s1 + $0xf0] sm:$0xff]
      %v221 = vld [vmem:[%s1 + $0xf8] sm:$0xff]
      %v222 = vld [vmem:[%s1 + $0x100] sm:$0xff]
      %v223 = vld [vmem:[%s1 + $0x108] sm:$0xff]
      %v224 = vld [vmem:[%s1 + $0x110] sm:$0xff]
      %v225 = vld [vmem:[%s1 + $0x118] sm:$0xff]
      %v226 = vld [vmem:[%s1 + $0x120] sm:$0xff]
      %v227 = vld [vmem:[%s1 + $0x128] sm:$0xff]
      %v228 = vld [vmem:[%s1 + $0x130] sm:$0xff]
      %v229 = vld [vmem:[%s1 + $0x138] sm:$0xff]
      %v230 = vld [vmem:[%s1 + $0x140] sm:$0xff]
      %v231 = vld [vmem:[%s1 + $0x148] sm:$0xff]
      %v232 = vld [vmem:[%s1 + $0x150] sm:$0xff]
      %v233 = vld [vmem:[%s1 + $0x158] sm:$0xff]
      %v234 = vld [vmem:[%s1 + $0x160] sm:$0xff]
      %v235 = vld [vmem:[%s1 + $0x168] sm:$0xff]
      %v236 = vld [vmem:[%s1 + $0x170] sm:$0xff]
      %v237 = vld [vmem:[%s1 + $0x178] sm:$0xff]
      %v238 = vld [vmem:[%s1 + $0x180] sm:$0xff]
      %v239 = vld [vmem:[%s1 + $0x188] sm:$0xff]
      %v240 = vld [vmem:[%s1 + $0x190] sm:$0xff]
      %v241 = vld [vmem:[%s1 + $0x198] sm:$0xff]
      %v242 = vld [vmem:[%s1 + $0x1a0] sm:$0xff]
      %v243 = vld [vmem:[%s1 + $0x1a8] sm:$0xff]
      %v244 = vld [vmem:[%s1 + $0x1b0] sm:$0xff]
      %v245 = vld [vmem:[%s1 + $0x1b8] sm:$0xff]
      %v246 = vld [vmem:[%s1 + $0x1c0] sm:$0xff]
      %v247 = vld [vmem:[%s1 + $0x1c8] sm:$0xff]
      %v248 = vld [vmem:[%s1 + $0x1d0] sm:$0xff]
      %v249 = vld [vmem:[%s1 + $0x1d8] sm:$0xff]
      %v250 = vld [vmem:[%s1 + $0x1e0] sm:$0xff]
      %v251 = vld [vmem:[%s1 + $0x1e8] sm:$0xff]
      %v252 = vld [vmem:[%s1 + $0x1f0] sm:$0xff]
      %v253 = vld [vmem:[%s1 + $0x1f8] sm:$0xff]
      %v254 = vld [vmem:[#allocation2] sm:$0xff]
      %v255 = vld [vmem:[#allocation3] sm:$0xff]
      %v256 = vld [vmem:[%s173] sm:$0xff]
      %v257 = vld [vmem:[%s173 + $0x8] sm:$0xff]
      %v258 = vld [vmem:[%s173 + $0x10] sm:$0xff]
      %v259 = vld [vmem:[%s173 + $0x18] sm:$0xff]
      %260 = vmatprep.subr.mxu0 %v251
      %261 = vmatpush1.msra.mxu0 %v250
      %262 = vmatprep.subr.mxu0 %v247
      %263 = vmatpush1.msra.mxu0 %v246
      %264 = vmatprep.subr.mxu0 %v243
      %265 = vmatpush1.msra.mxu0 %v242
      %266 = vmatprep.subr.mxu0 %v239
      %267 = vmatpush1.msra.mxu0 %v238
      %268 = vmatprep.subr.mxu0 %v235
      %269 = vmatpush1.msra.mxu0 %v234
      %270 = vmatprep.subr.mxu0 %v231
      %271 = vmatpush1.msra.mxu0 %v230
      %272 = vmatprep.subr.mxu0 %v227
      %273 = vmatpush1.msra.mxu0 %v226
      %274 = vmatprep.subr.mxu0 %v223
      %275 = vmatpush1.msra.mxu0 %v222
      %276 = vmatprep.subr.mxu0 %v219
      %277 = vmatpush1.msra.mxu0 %v218
      %278 = vmatprep.subr.mxu0 %v215
      %279 = vmatpush1.msra.mxu0 %v214
      %280 = vmatprep.subr.mxu0 %v211
      %281 = vmatpush1.msra.mxu0 %v210
      %282 = vmatprep.subr.mxu0 %v207
      %283 = vmatpush1.msra.mxu0 %v206
      %284 = vmatprep.subr.mxu0 %v203
      %285 = vmatpush1.msra.mxu0 %v202
      %286 = vmatprep.subr.mxu0 %v199
      %287 = vmatpush1.msra.mxu0 %v198
      %288 = vmatprep.subr.mxu0 %v195
      %289 = vmatpush1.msra.mxu0 %v194
      %290 = vmatprep.subr.mxu0 %v191
      %291 = vmatpush1.msra.mxu0 %v190
      %292 = vmatprep.subr.mxu0 0.0
      %293 = vmatpush2.msra.mxu0 0.0
      %294 = vmatprep.subr.mxu0 0.0
      %295 = vmatpush2.msra.mxu0 0.0
      %296 = vmatprep.subr.mxu0 0.0
      %297 = vmatpush2.msra.mxu0 0.0
      %298 = vmatprep.subr.mxu0 0.0
      %299 = vmatpush2.msra.mxu0 0.0
      %300 = vmatprep.subr.mxu0 0.0
      %301 = vmatpush2.msra.mxu0 0.0
      %302 = vmatprep.subr.mxu0 0.0
      %303 = vmatpush2.msra.mxu0 0.0
      %304 = vmatprep.subr.mxu0 0.0
      %305 = vmatpush2.msra.mxu0 0.0
      %306 = vmatprep.subr.mxu0 0.0
      %307 = vmatpush2.msra.mxu0 0.0
      %308 = vmatprep.subr.mxu0 0.0
      %309 = vmatpush2.msra.mxu0 0.0
      %310 = vmatprep.subr.mxu0 0.0
      %311 = vmatpush2.msra.mxu0 0.0
      %312 = vmatprep.subr.mxu0 0.0
      %313 = vmatpush2.msra.mxu0 0.0
      %314 = vmatprep.subr.mxu0 0.0
      %315 = vmatpush2.msra.mxu0 0.0
      %316 = vmatprep.subr.mxu0 0.0
      %317 = vmatpush2.msra.mxu0 0.0
      %318 = vmatprep.subr.mxu0 0.0
      %319 = vmatpush2.msra.mxu0 0.0
      %320 = vmatprep.subr.mxu0 0.0
      %321 = vmatpush2.msra.mxu0 0.0
      %322 = vmatprep.subr.mxu0 0.0
      %323 = vmatpush2.msra.mxu0 0.0
      %324 = vmatprep.mubr.f32.mxu0 0.0
      %325 = vmatmul.mubr.f32.gmra.mxu0 %v254
      %v326 = vpop.f32.mrf.mxu0
      %v327 = vadd.f32 0.0, %v326
      %v328 = vpop.f32.mrf.mxu0
      %v329 = vadd.f32 0.0, %v328
      %330 = vdwg.mxu0
      %331 = vmatprep.subr.mxu0 %v253
      %332 = vmatpush1.msra.mxu0 %v252
      %333 = vmatprep.subr.mxu0 %v249
      %334 = vmatpush1.msra.mxu0 %v248
      %335 = vmatprep.subr.mxu0 %v245
      %336 = vmatpush1.msra.mxu0 %v244
      %337 = vmatprep.subr.mxu0 %v241
      %338 = vmatpush1.msra.mxu0 %v240
      %339 = vmatprep.subr.mxu0 %v237
      %340 = vmatpush1.msra.mxu0 %v236
      %341 = vmatprep.subr.mxu0 %v233
      %342 = vmatpush1.msra.mxu0 %v232
      %343 = vmatprep.subr.mxu0 %v229
      %344 = vmatpush1.msra.mxu0 %v228
      %345 = vmatprep.subr.mxu0 %v225
      %346 = vmatpush1.msra.mxu0 %v224
      %347 = vmatprep.subr.mxu0 %v221
      %348 = vmatpush1.msra.mxu0 %v220
      %349 = vmatprep.subr.mxu0 %v217
      %350 = vmatpush1.msra.mxu0 %v216
      %351 = vmatprep.subr.mxu0 %v213
      %352 = vmatpush1.msra.mxu0 %v212
      %353 = vmatprep.subr.mxu0 %v209
      %354 = vmatpush1.msra.mxu0 %v208
      %355 = vmatprep.subr.mxu0 %v205
      %356 = vmatpush1.msra.mxu0 %v204
      %357 = vmatprep.subr.mxu0 %v201
      %358 = vmatpush1.msra.mxu0 %v200
      %359 = vmatprep.subr.mxu0 %v197
      %360 = vmatpush1.msra.mxu0 %v196
      %361 = vmatprep.subr.mxu0 %v193
      %362 = vmatpush1.msra.mxu0 %v192
      %363 = vmatprep.subr.mxu0 0.0
      %364 = vmatpush2.msra.mxu0 0.0
      %365 = vmatprep.subr.mxu0 0.0
      %366 = vmatpush2.msra.mxu0 0.0
      %367 = vmatprep.subr.mxu0 0.0
      %368 = vmatpush2.msra.mxu0 0.0
      %369 = vmatprep.subr.mxu0 0.0
      %370 = vmatpush2.msra.mxu0 0.0
      %371 = vmatprep.subr.mxu0 0.0
      %372 = vmatpush2.msra.mxu0 0.0
      %373 = vmatprep.subr.mxu0 0.0
      %374 = vmatpush2.msra.mxu0 0.0
      %375 = vmatprep.subr.mxu0 0.0
      %376 = vmatpush2.msra.mxu0 0.0
      %377 = vmatprep.subr.mxu0 0.0
      %378 = vmatpush2.msra.mxu0 0.0
      %379 = vmatprep.subr.mxu0 0.0
      %380 = vmatpush2.msra.mxu0 0.0
      %381 = vmatprep.subr.mxu0 0.0
      %382 = vmatpush2.msra.mxu0 0.0
      %383 = vmatprep.subr.mxu0 0.0
      %384 = vmatpush2.msra.mxu0 0.0
      %385 = vmatprep.subr.mxu0 0.0
      %386 = vmatpush2.msra.mxu0 0.0
      %387 = vmatprep.subr.mxu0 0.0
      %388 = vmatpush2.msra.mxu0 0.0
      %389 = vmatprep.subr.mxu0 0.0
      %390 = vmatpush2.msra.mxu0 0.0
      %391 = vmatprep.subr.mxu0 0.0
      %392 = vmatpush2.msra.mxu0 0.0
      %393 = vmatprep.subr.mxu0 0.0
      %394 = vmatpush2.msra.mxu0 0.0
      %395 = vmatprep.mubr.f32.mxu0 0.0
      %396 = vmatmul.mubr.f32.gmra.mxu0 %v254
      %v397 = vpop.f32.mrf.mxu0
      %v398 = vadd.f32 0.0, %v397
      %v399 = vpop.f32.mrf.mxu0
      %v400 = vadd.f32 0.0, %v399
      %401 = vdwg.mxu0
      %v402 = vadd.f32 %v256, %v327
      %v403 = vadd.f32 %v257, %v329
      %v404 = vadd.f32 %v258, %v398
      %v405 = vadd.f32 %v259, %v400
      %v406 = vxor.u32 %v402, 2147483648
      %v407 = vxor.u32 %v403, 2147483648
      %v408 = vxor.u32 %v404, 2147483648
      %v409 = vmul.f32 %v406, 1.442695
      %v410 = vpow.pop %v409
      %v411 = vmul.f32 %v407, 1.442695
      %v412 = vpow.pop %v411
      %v413 = vmul.f32 %v408, 1.442695
      %v414 = vpow.pop %v413
      %v415 = vadd.f32 %v410, 1.0
      %v416 = vadd.f32 %v412, 1.0
      %v417 = vadd.f32 %v414, 1.0
      %v418 = vrcp.pop %v415
      %v419 = vmul.f32 1.0, %v418
      %v420 = vrcp.pop %v416
      %v421 = vmul.f32 1.0, %v420
      %v422 = vrcp.pop %v417
      %v423 = vmul.f32 1.0, %v422
      %v424 = vtanh.pop %v405
      %v425 = vmul.f32 %v421, %v255
      %v426 = vmul.f32 %v419, %v424
      %v427 = vadd.f32 %v425, %v426
      %v428 = vtanh.pop %v427
      %v429 = vmul.f32 %v423, %v428
      %430 = vst [vmem:[%s182] sm:$0xff] %v429
      %s431 = scalar_lea.vmem %s173, 32
      %v432 = vld [vmem:[%s431] sm:$0xff]
      %v433 = vld [vmem:[%s431 + $0x8] sm:$0xff]
      %v434 = vld [vmem:[%s431 + $0x10] sm:$0xff]
      %v435 = vld [vmem:[%s431 + $0x18] sm:$0xff]
      %436 = vmatprep.subr.mxu0 %v251
      %437 = vmatpush1.msra.mxu0 %v250
      %438 = vmatprep.subr.mxu0 %v247
      %439 = vmatpush1.msra.mxu0 %v246
      %440 = vmatprep.subr.mxu0 %v243
      %441 = vmatpush1.msra.mxu0 %v242
      %442 = vmatprep.subr.mxu0 %v239
      %443 = vmatpush1.msra.mxu0 %v238
      %444 = vmatprep.subr.mxu0 %v235
      %445 = vmatpush1.msra.mxu0 %v234
      %446 = vmatprep.subr.mxu0 %v231
      %447 = vmatpush1.msra.mxu0 %v230
      %448 = vmatprep.subr.mxu0 %v227
      %449 = vmatpush1.msra.mxu0 %v226
      %450 = vmatprep.subr.mxu0 %v223
      %451 = vmatpush1.msra.mxu0 %v222
      %452 = vmatprep.subr.mxu0 %v219
      %453 = vmatpush1.msra.mxu0 %v218
      %454 = vmatprep.subr.mxu0 %v215
      %455 = vmatpush1.msra.mxu0 %v214
      %456 = vmatprep.subr.mxu0 %v211
      %457 = vmatpush1.msra.mxu0 %v210
      %458 = vmatprep.subr.mxu0 %v207
      %459 = vmatpush1.msra.mxu0 %v206
      %460 = vmatprep.subr.mxu0 %v203
      %461 = vmatpush1.msra.mxu0 %v202
      %462 = vmatprep.subr.mxu0 %v199
      %463 = vmatpush1.msra.mxu0 %v198
      %464 = vmatprep.subr.mxu0 %v195
      %465 = vmatpush1.msra.mxu0 %v194
      %466 = vmatprep.subr.mxu0 %v191
      %467 = vmatpush1.msra.mxu0 %v190
      %468 = vmatprep.subr.mxu0 0.0
      %469 = vmatpush2.msra.mxu0 0.0
      %470 = vmatprep.subr.mxu0 0.0
      %471 = vmatpush2.msra.mxu0 0.0
      %472 = vmatprep.subr.mxu0 0.0
      %473 = vmatpush2.msra.mxu0 0.0
      %474 = vmatprep.subr.mxu0 0.0
      %475 = vmatpush2.msra.mxu0 0.0
      %476 = vmatprep.subr.mxu0 0.0
      %477 = vmatpush2.msra.mxu0 0.0
      %478 = vmatprep.subr.mxu0 0.0
      %479 = vmatpush2.msra.mxu0 0.0
      %480 = vmatprep.subr.mxu0 0.0
      %481 = vmatpush2.msra.mxu0 0.0
      %482 = vmatprep.subr.mxu0 0.0
      %483 = vmatpush2.msra.mxu0 0.0
      %484 = vmatprep.subr.mxu0 0.0
      %485 = vmatpush2.msra.mxu0 0.0
      %486 = vmatprep.subr.mxu0 0.0
      %487 = vmatpush2.msra.mxu0 0.0
      %488 = vmatprep.subr.mxu0 0.0
      %489 = vmatpush2.msra.mxu0 0.0
      %490 = vmatprep.subr.mxu0 0.0
      %491 = vmatpush2.msra.mxu0 0.0
      %492 = vmatprep.subr.mxu0 0.0
      %493 = vmatpush2.msra.mxu0 0.0
      %494 = vmatprep.subr.mxu0 0.0
      %495 = vmatpush2.msra.mxu0 0.0
      %496 = vmatprep.subr.mxu0 0.0
      %497 = vmatpush2.msra.mxu0 0.0
      %498 = vmatprep.subr.mxu0 0.0
      %499 = vmatpush2.msra.mxu0 0.0
      %500 = vmatprep.mubr.f32.mxu0 0.0
      %501 = vmatmul.mubr.f32.gmra.mxu0 %v429
      %v502 = vpop.f32.mrf.mxu0
      %v503 = vadd.f32 0.0, %v502
      %v504 = vpop.f32.mrf.mxu0
      %v505 = vadd.f32 0.0, %v504
      %506 = vdwg.mxu0
      %507 = vmatprep.subr.mxu0 %v253
      %508 = vmatpush1.msra.mxu0 %v252
      %509 = vmatprep.subr.mxu0 %v249
      %510 = vmatpush1.msra.mxu0 %v248
      %511 = vmatprep.subr.mxu0 %v245
      %512 = vmatpush1.msra.mxu0 %v244
      %513 = vmatprep.subr.mxu0 %v241
      %514 = vmatpush1.msra.mxu0 %v240
      %515 = vmatprep.subr.mxu0 %v237
      %516 = vmatpush1.msra.mxu0 %v236
      %517 = vmatprep.subr.mxu0 %v233
      %518 = vmatpush1.msra.mxu0 %v232
      %519 = vmatprep.subr.mxu0 %v229
      %520 = vmatpush1.msra.mxu0 %v228
      %521 = vmatprep.subr.mxu0 %v225
      %522 = vmatpush1.msra.mxu0 %v224
      %523 = vmatprep.subr.mxu0 %v221
      %524 = vmatpush1.msra.mxu0 %v220
      %525 = vmatprep.subr.mxu0 %v217
      %526 = vmatpush1.msra.mxu0 %v216
      %527 = vmatprep.subr.mxu0 %v213
      %528 = vmatpush1.msra.mxu0 %v212
      %529 = vmatprep.subr.mxu0 %v209
      %530 = vmatpush1.msra.mxu0 %v208
      %531 = vmatprep.subr.mxu0 %v205
      %532 = vmatpush1.msra.mxu0 %v204
      %533 = vmatprep.subr.mxu0 %v201
      %534 = vmatpush1.msra.mxu0 %v200
      %535 = vmatprep.subr.mxu0 %v197
      %536 = vmatpush1.msra.mxu0 %v196
      %537 = vmatprep.subr.mxu0 %v193
      %538 = vmatpush1.msra.mxu0 %v192
      %539 = vmatprep.subr.mxu0 0.0
      %540 = vmatpush2.msra.mxu0 0.0
      %541 = vmatprep.subr.mxu0 0.0
      %542 = vmatpush2.msra.mxu0 0.0
      %543 = vmatprep.subr.mxu0 0.0
      %544 = vmatpush2.msra.mxu0 0.0
      %545 = vmatprep.subr.mxu0 0.0
      %546 = vmatpush2.msra.mxu0 0.0
      %547 = vmatprep.subr.mxu0 0.0
      %548 = vmatpush2.msra.mxu0 0.0
      %549 = vmatprep.subr.mxu0 0.0
      %550 = vmatpush2.msra.mxu0 0.0
      %551 = vmatprep.subr.mxu0 0.0
      %552 = vmatpush2.msra.mxu0 0.0
      %553 = vmatprep.subr.mxu0 0.0
      %554 = vmatpush2.msra.mxu0 0.0
      %555 = vmatprep.subr.mxu0 0.0
      %556 = vmatpush2.msra.mxu0 0.0
      %557 = vmatprep.subr.mxu0 0.0
      %558 = vmatpush2.msra.mxu0 0.0
      %559 = vmatprep.subr.mxu0 0.0
      %560 = vmatpush2.msra.mxu0 0.0
      %561 = vmatprep.subr.mxu0 0.0
      %562 = vmatpush2.msra.mxu0 0.0
      %563 = vmatprep.subr.mxu0 0.0
      %564 = vmatpush2.msra.mxu0 0.0
      %565 = vmatprep.subr.mxu0 0.0
      %566 = vmatpush2.msra.mxu0 0.0
      %567 = vmatprep.subr.mxu0 0.0
      %568 = vmatpush2.msra.mxu0 0.0
      %569 = vmatprep.subr.mxu0 0.0
      %570 = vmatpush2.msra.mxu0 0.0
      %571 = vmatprep.mubr.f32.mxu0 0.0
      %572 = vmatmul.mubr.f32.gmra.mxu0 %v429
      %v573 = vpop.f32.mrf.mxu0
      %v574 = vadd.f32 0.0, %v573
      %v575 = vpop.f32.mrf.mxu0
      %v576 = vadd.f32 0.0, %v575
      %577 = vdwg.mxu0
      %v578 = vadd.f32 %v432, %v503
      %v579 = vadd.f32 %v433, %v505
      %v580 = vadd.f32 %v434, %v574
      %v581 = vadd.f32 %v435, %v576
      %v582 = vxor.u32 %v578, 2147483648
      %v583 = vxor.u32 %v579, 2147483648
      %v584 = vxor.u32 %v580, 2147483648
      %v585 = vmul.f32 %v582, 1.442695
      %v586 = vpow.pop %v585
      %v587 = vmul.f32 %v583, 1.442695
      %v588 = vpow.pop %v587
      %v589 = vmul.f32 %v584, 1.442695
      %v590 = vpow.pop %v589
      %v591 = vadd.f32 %v586, 1.0
      %v592 = vadd.f32 %v588, 1.0
      %v593 = vadd.f32 %v590, 1.0
      %v594 = vrcp.pop %v591
      %v595 = vmul.f32 1.0, %v594
      %v596 = vrcp.pop %v592
      %v597 = vmul.f32 1.0, %v596
      %v598 = vrcp.pop %v593
      %v599 = vmul.f32 1.0, %v598
      %v600 = vtanh.pop %v581
      %v601 = vmul.f32 %v597, %v427
      %v602 = vmul.f32 %v595, %v600
      %v603 = vadd.f32 %v601, %v602
      %v604 = vtanh.pop %v603
      %v605 = vmul.f32 %v599, %v604
      %s606 = scalar_lea.vmem %s182, 8
      %607 = vst [vmem:[%s606] sm:$0xff] %v605
      %s608 = scalar_lea.vmem %s173, 64
      %v609 = vld [vmem:[%s608] sm:$0xff]
      %v610 = vld [vmem:[%s608 + $0x8] sm:$0xff]
      %v611 = vld [vmem:[%s608 + $0x10] sm:$0xff]
      %v612 = vld [vmem:[%s608 + $0x18] sm:$0xff]
      %613 = vmatprep.subr.mxu0 %v251
      %614 = vmatpush1.msra.mxu0 %v250
      %615 = vmatprep.subr.mxu0 %v247
      %616 = vmatpush1.msra.mxu0 %v246
      %617 = vmatprep.subr.mxu0 %v243
      %618 = vmatpush1.msra.mxu0 %v242
      %619 = vmatprep.subr.mxu0 %v239
      %620 = vmatpush1.msra.mxu0 %v238
      %621 = vmatprep.subr.mxu0 %v235
      %622 = vmatpush1.msra.mxu0 %v234
      %623 = vmatprep.subr.mxu0 %v231
      %624 = vmatpush1.msra.mxu0 %v230
      %625 = vmatprep.subr.mxu0 %v227
      %626 = vmatpush1.msra.mxu0 %v226
      %627 = vmatprep.subr.mxu0 %v223
      %628 = vmatpush1.msra.mxu0 %v222
      %629 = vmatprep.subr.mxu0 %v219
      %630 = vmatpush1.msra.mxu0 %v218
      %631 = vmatprep.subr.mxu0 %v215
      %632 = vmatpush1.msra.mxu0 %v214
      %633 = vmatprep.subr.mxu0 %v211
      %634 = vmatpush1.msra.mxu0 %v210
      %635 = vmatprep.subr.mxu0 %v207
      %636 = vmatpush1.msra.mxu0 %v206
      %637 = vmatprep.subr.mxu0 %v203
      %638 = vmatpush1.msra.mxu0 %v202
      %639 = vmatprep.subr.mxu0 %v199
      %640 = vmatpush1.msra.mxu0 %v198
      %641 = vmatprep.subr.mxu0 %v195
      %642 = vmatpush1.msra.mxu0 %v194
      %643 = vmatprep.subr.mxu0 %v191
      %644 = vmatpush1.msra.mxu0 %v190
      %645 = vmatprep.subr.mxu0 0.0
      %646 = vmatpush2.msra.mxu0 0.0
      %647 = vmatprep.subr.mxu0 0.0
      %648 = vmatpush2.msra.mxu0 0.0
      %649 = vmatprep.subr.mxu0 0.0
      %650 = vmatpush2.msra.mxu0 0.0
      %651 = vmatprep.subr.mxu0 0.0
      %652 = vmatpush2.msra.mxu0 0.0
      %653 = vmatprep.subr.mxu0 0.0
      %654 = vmatpush2.msra.mxu0 0.0
      %655 = vmatprep.subr.mxu0 0.0
      %656 = vmatpush2.msra.mxu0 0.0
      %657 = vmatprep.subr.mxu0 0.0
      %658 = vmatpush2.msra.mxu0 0.0
      %659 = vmatprep.subr.mxu0 0.0
      %660 = vmatpush2.msra.mxu0 0.0
      %661 = vmatprep.subr.mxu0 0.0
      %662 = vmatpush2.msra.mxu0 0.0
      %663 = vmatprep.subr.mxu0 0.0
      %664 = vmatpush2.msra.mxu0 0.0
      %665 = vmatprep.subr.mxu0 0.0
      %666 = vmatpush2.msra.mxu0 0.0
      %667 = vmatprep.subr.mxu0 0.0
      %668 = vmatpush2.msra.mxu0 0.0
      %669 = vmatprep.subr.mxu0 0.0
      %670 = vmatpush2.msra.mxu0 0.0
      %671 = vmatprep.subr.mxu0 0.0
      %672 = vmatpush2.msra.mxu0 0.0
      %673 = vmatprep.subr.mxu0 0.0
      %674 = vmatpush2.msra.mxu0 0.0
      %675 = vmatprep.subr.mxu0 0.0
      %676 = vmatpush2.msra.mxu0 0.0
      %677 = vmatprep.mubr.f32.mxu0 0.0
      %678 = vmatmul.mubr.f32.gmra.mxu0 %v605
      %v679 = vpop.f32.mrf.mxu0
      %v680 = vadd.f32 0.0, %v679
      %v681 = vpop.f32.mrf.mxu0
      %v682 = vadd.f32 0.0, %v681
      %683 = vdwg.mxu0
      %684 = vmatprep.subr.mxu0 %v253
      %685 = vmatpush1.msra.mxu0 %v252
      %686 = vmatprep.subr.mxu0 %v249
      %687 = vmatpush1.msra.mxu0 %v248
      %688 = vmatprep.subr.mxu0 %v245
      %689 = vmatpush1.msra.mxu0 %v244
      %690 = vmatprep.subr.mxu0 %v241
      %691 = vmatpush1.msra.mxu0 %v240
      %692 = vmatprep.subr.mxu0 %v237
      %693 = vmatpush1.msra.mxu0 %v236
      %694 = vmatprep.subr.mxu0 %v233
      %695 = vmatpush1.msra.mxu0 %v232
      %696 = vmatprep.subr.mxu0 %v229
      %697 = vmatpush1.msra.mxu0 %v228
      %698 = vmatprep.subr.mxu0 %v225
      %699 = vmatpush1.msra.mxu0 %v224
      %700 = vmatprep.subr.mxu0 %v221
      %701 = vmatpush1.msra.mxu0 %v220
      %702 = vmatprep.subr.mxu0 %v217
      %703 = vmatpush1.msra.mxu0 %v216
      %704 = vmatprep.subr.mxu0 %v213
      %705 = vmatpush1.msra.mxu0 %v212
      %706 = vmatprep.subr.mxu0 %v209
      %707 = vmatpush1.msra.mxu0 %v208
      %708 = vmatprep.subr.mxu0 %v205
      %709 = vmatpush1.msra.mxu0 %v204
      %710 = vmatprep.subr.mxu0 %v201
      %711 = vmatpush1.msra.mxu0 %v200
      %712 = vmatprep.subr.mxu0 %v197
      %713 = vmatpush1.msra.mxu0 %v196
      %714 = vmatprep.subr.mxu0 %v193
      %715 = vmatpush1.msra.mxu0 %v192
      %716 = vmatprep.subr.mxu0 0.0
      %717 = vmatpush2.msra.mxu0 0.0
      %718 = vmatprep.subr.mxu0 0.0
      %719 = vmatpush2.msra.mxu0 0.0
      %720 = vmatprep.subr.mxu0 0.0
      %721 = vmatpush2.msra.mxu0 0.0
      %722 = vmatprep.subr.mxu0 0.0
      %723 = vmatpush2.msra.mxu0 0.0
      %724 = vmatprep.subr.mxu0 0.0
      %725 = vmatpush2.msra.mxu0 0.0
      %726 = vmatprep.subr.mxu0 0.0
      %727 = vmatpush2.msra.mxu0 0.0
      %728 = vmatprep.subr.mxu0 0.0
      %729 = vmatpush2.msra.mxu0 0.0
      %730 = vmatprep.subr.mxu0 0.0
      %731 = vmatpush2.msra.mxu0 0.0
      %732 = vmatprep.subr.mxu0 0.0
      %733 = vmatpush2.msra.mxu0 0.0
      %734 = vmatprep.subr.mxu0 0.0
      %735 = vmatpush2.msra.mxu0 0.0
      %736 = vmatprep.subr.mxu0 0.0
      %737 = vmatpush2.msra.mxu0 0.0
      %738 = vmatprep.subr.mxu0 0.0
      %739 = vmatpush2.msra.mxu0 0.0
      %740 = vmatprep.subr.mxu0 0.0
      %741 = vmatpush2.msra.mxu0 0.0
      %742 = vmatprep.subr.mxu0 0.0
      %743 = vmatpush2.msra.mxu0 0.0
      %744 = vmatprep.subr.mxu0 0.0
      %745 = vmatpush2.msra.mxu0 0.0
      %746 = vmatprep.subr.mxu0 0.0
      %747 = vmatpush2.msra.mxu0 0.0
      %748 = vmatprep.mubr.f32.mxu0 0.0
      %749 = vmatmul.mubr.f32.gmra.mxu0 %v605
      %v750 = vpop.f32.mrf.mxu0
      %v751 = vadd.f32 0.0, %v750
      %v752 = vpop.f32.mrf.mxu0
      %v753 = vadd.f32 0.0, %v752
      %754 = vdwg.mxu0
      %v755 = vadd.f32 %v609, %v680
      %v756 = vadd.f32 %v610, %v682
      %v757 = vadd.f32 %v611, %v751
      %v758 = vadd.f32 %v612, %v753
      %v759 = vxor.u32 %v755, 2147483648
      %v760 = vxor.u32 %v756, 2147483648
      %v761 = vxor.u32 %v757, 2147483648
      %v762 = vmul.f32 %v759, 1.442695
      %v763 = vpow.pop %v762
      %v764 = vmul.f32 %v760, 1.442695
      %v765 = vpow.pop %v764
      %v766 = vmul.f32 %v761, 1.442695
      %v767 = vpow.pop %v766
      %v768 = vadd.f32 %v763, 1.0
      %v769 = vadd.f32 %v765, 1.0
      %v770 = vadd.f32 %v767, 1.0
      %v771 = vrcp.pop %v768
      %v772 = vmul.f32 1.0, %v771
      %v773 = vrcp.pop %v769
      %v774 = vmul.f32 1.0, %v773
      %v775 = vrcp.pop %v770
      %v776 = vmul.f32 1.0, %v775
      %v777 = vtanh.pop %v758
      %v778 = vmul.f32 %v774, %v603
      %v779 = vmul.f32 %v772, %v777
      %v780 = vadd.f32 %v778, %v779
      %v781 = vtanh.pop %v780
      %v782 = vmul.f32 %v776, %v781
      %s783 = scalar_lea.vmem %s182, 16
      %784 = vst [vmem:[%s783] sm:$0xff] %v782
      %s785 = scalar_lea.vmem %s173, 96
      %v786 = vld [vmem:[%s785] sm:$0xff]
      %v787 = vld [vmem:[%s785 + $0x8] sm:$0xff]
      %v788 = vld [vmem:[%s785 + $0x10] sm:$0xff]
      %v789 = vld [vmem:[%s785 + $0x18] sm:$0xff]
      %790 = vmatprep.subr.mxu0 %v251
      %791 = vmatpush1.msra.mxu0 %v250
      %792 = vmatprep.subr.mxu0 %v247
      %793 = vmatpush1.msra.mxu0 %v246
      %794 = vmatprep.subr.mxu0 %v243
      %795 = vmatpush1.msra.mxu0 %v242
      %796 = vmatprep.subr.mxu0 %v239
      %797 = vmatpush1.msra.mxu0 %v238
      %798 = vmatprep.subr.mxu0 %v235
      %799 = vmatpush1.msra.mxu0 %v234
      %800 = vmatprep.subr.mxu0 %v231
      %801 = vmatpush1.msra.mxu0 %v230
      %802 = vmatprep.subr.mxu0 %v227
      %803 = vmatpush1.msra.mxu0 %v226
      %804 = vmatprep.subr.mxu0 %v223
      %805 = vmatpush1.msra.mxu0 %v222
      %806 = vmatprep.subr.mxu0 %v219
      %807 = vmatpush1.msra.mxu0 %v218
      %808 = vmatprep.subr.mxu0 %v215
      %809 = vmatpush1.msra.mxu0 %v214
      %810 = vmatprep.subr.mxu0 %v211
      %811 = vmatpush1.msra.mxu0 %v210
      %812 = vmatprep.subr.mxu0 %v207
      %813 = vmatpush1.msra.mxu0 %v206
      %814 = vmatprep.subr.mxu0 %v203
      %815 = vmatpush1.msra.mxu0 %v202
      %816 = vmatprep.subr.mxu0 %v199
      %817 = vmatpush1.msra.mxu0 %v198
      %818 = vmatprep.subr.mxu0 %v195
      %819 = vmatpush1.msra.mxu0 %v194
      %820 = vmatprep.subr.mxu0 %v191
      %821 = vmatpush1.msra.mxu0 %v190
      %822 = vmatprep.subr.mxu0 0.0
      %823 = vmatpush2.msra.mxu0 0.0
      %824 = vmatprep.subr.mxu0 0.0
      %825 = vmatpush2.msra.mxu0 0.0
      %826 = vmatprep.subr.mxu0 0.0
      %827 = vmatpush2.msra.mxu0 0.0
      %828 = vmatprep.subr.mxu0 0.0
      %829 = vmatpush2.msra.mxu0 0.0
      %830 = vmatprep.subr.mxu0 0.0
      %831 = vmatpush2.msra.mxu0 0.0
      %832 = vmatprep.subr.mxu0 0.0
      %833 = vmatpush2.msra.mxu0 0.0
      %834 = vmatprep.subr.mxu0 0.0
      %835 = vmatpush2.msra.mxu0 0.0
      %836 = vmatprep.subr.mxu0 0.0
      %837 = vmatpush2.msra.mxu0 0.0
      %838 = vmatprep.subr.mxu0 0.0
      %839 = vmatpush2.msra.mxu0 0.0
      %840 = vmatprep.subr.mxu0 0.0
      %841 = vmatpush2.msra.mxu0 0.0
      %842 = vmatprep.subr.mxu0 0.0
      %843 = vmatpush2.msra.mxu0 0.0
      %844 = vmatprep.subr.mxu0 0.0
      %845 = vmatpush2.msra.mxu0 0.0
      %846 = vmatprep.subr.mxu0 0.0
      %847 = vmatpush2.msra.mxu0 0.0
      %848 = vmatprep.subr.mxu0 0.0
      %849 = vmatpush2.msra.mxu0 0.0
      %850 = vmatprep.subr.mxu0 0.0
      %851 = vmatpush2.msra.mxu0 0.0
      %852 = vmatprep.subr.mxu0 0.0
      %853 = vmatpush2.msra.mxu0 0.0
      %854 = vmatprep.mubr.f32.mxu0 0.0
      %855 = vmatmul.mubr.f32.gmra.mxu0 %v782
      %v856 = vpop.f32.mrf.mxu0
      %v857 = vadd.f32 0.0, %v856
      %v858 = vpop.f32.mrf.mxu0
      %v859 = vadd.f32 0.0, %v858
      %860 = vdwg.mxu0
      %861 = vmatprep.subr.mxu0 %v253
      %862 = vmatpush1.msra.mxu0 %v252
      %863 = vmatprep.subr.mxu0 %v249
      %864 = vmatpush1.msra.mxu0 %v248
      %865 = vmatprep.subr.mxu0 %v245
      %866 = vmatpush1.msra.mxu0 %v244
      %867 = vmatprep.subr.mxu0 %v241
      %868 = vmatpush1.msra.mxu0 %v240
      %869 = vmatprep.subr.mxu0 %v237
      %870 = vmatpush1.msra.mxu0 %v236
      %871 = vmatprep.subr.mxu0 %v233
      %872 = vmatpush1.msra.mxu0 %v232
      %873 = vmatprep.subr.mxu0 %v229
      %874 = vmatpush1.msra.mxu0 %v228
      %875 = vmatprep.subr.mxu0 %v225
      %876 = vmatpush1.msra.mxu0 %v224
      %877 = vmatprep.subr.mxu0 %v221
      %878 = vmatpush1.msra.mxu0 %v220
      %879 = vmatprep.subr.mxu0 %v217
      %880 = vmatpush1.msra.mxu0 %v216
      %881 = vmatprep.subr.mxu0 %v213
      %882 = vmatpush1.msra.mxu0 %v212
      %883 = vmatprep.subr.mxu0 %v209
      %884 = vmatpush1.msra.mxu0 %v208
      %885 = vmatprep.subr.mxu0 %v205
      %886 = vmatpush1.msra.mxu0 %v204
      %887 = vmatprep.subr.mxu0 %v201
      %888 = vmatpush1.msra.mxu0 %v200
      %889 = vmatprep.subr.mxu0 %v197
      %890 = vmatpush1.msra.mxu0 %v196
      %891 = vmatprep.subr.mxu0 %v193
      %892 = vmatpush1.msra.mxu0 %v192
      %893 = vmatprep.subr.mxu0 0.0
      %894 = vmatpush2.msra.mxu0 0.0
      %895 = vmatprep.subr.mxu0 0.0
      %896 = vmatpush2.msra.mxu0 0.0
      %897 = vmatprep.subr.mxu0 0.0
      %898 = vmatpush2.msra.mxu0 0.0
      %899 = vmatprep.subr.mxu0 0.0
      %900 = vmatpush2.msra.mxu0 0.0
      %901 = vmatprep.subr.mxu0 0.0
      %902 = vmatpush2.msra.mxu0 0.0
      %903 = vmatprep.subr.mxu0 0.0
      %904 = vmatpush2.msra.mxu0 0.0
      %905 = vmatprep.subr.mxu0 0.0
      %906 = vmatpush2.msra.mxu0 0.0
      %907 = vmatprep.subr.mxu0 0.0
      %908 = vmatpush2.msra.mxu0 0.0
      %909 = vmatprep.subr.mxu0 0.0
      %910 = vmatpush2.msra.mxu0 0.0
      %911 = vmatprep.subr.mxu0 0.0
      %912 = vmatpush2.msra.mxu0 0.0
      %913 = vmatprep.subr.mxu0 0.0
      %914 = vmatpush2.msra.mxu0 0.0
      %915 = vmatprep.subr.mxu0 0.0
      %916 = vmatpush2.msra.mxu0 0.0
      %917 = vmatprep.subr.mxu0 0.0
      %918 = vmatpush2.msra.mxu0 0.0
      %919 = vmatprep.subr.mxu0 0.0
      %920 = vmatpush2.msra.mxu0 0.0
      %921 = vmatprep.subr.mxu0 0.0
      %922 = vmatpush2.msra.mxu0 0.0
      %923 = vmatprep.subr.mxu0 0.0
      %924 = vmatpush2.msra.mxu0 0.0
      %925 = vmatprep.mubr.f32.mxu0 0.0
      %926 = vmatmul.mubr.f32.gmra.mxu0 %v782
      %v927 = vpop.f32.mrf.mxu0
      %v928 = vadd.f32 0.0, %v927
      %v929 = vpop.f32.mrf.mxu0
      %v930 = vadd.f32 0.0, %v929
      %931 = vdwg.mxu0
      %v932 = vadd.f32 %v786, %v857
      %v933 = vadd.f32 %v787, %v859
      %v934 = vadd.f32 %v788, %v928
      %v935 = vadd.f32 %v789, %v930
      %v936 = vxor.u32 %v932, 2147483648
      %v937 = vxor.u32 %v933, 2147483648
      %v938 = vxor.u32 %v934, 2147483648
      %v939 = vmul.f32 %v936, 1.442695
      %v940 = vpow.pop %v939
      %v941 = vmul.f32 %v937, 1.442695
      %v942 = vpow.pop %v941
      %v943 = vmul.f32 %v938, 1.442695
      %v944 = vpow.pop %v943
      %v945 = vadd.f32 %v940, 1.0
      %v946 = vadd.f32 %v942, 1.0
      %v947 = vadd.f32 %v944, 1.0
      %v948 = vrcp.pop %v945
      %v949 = vmul.f32 1.0, %v948
      %v950 = vrcp.pop %v946
      %v951 = vmul.f32 1.0, %v950
      %v952 = vrcp.pop %v947
      %v953 = vmul.f32 1.0, %v952
      %v954 = vtanh.pop %v935
      %v955 = vmul.f32 %v951, %v780
      %v956 = vmul.f32 %v949, %v954
      %v957 = vadd.f32 %v955, %v956
      %v958 = vtanh.pop %v957
      %v959 = vmul.f32 %v953, %v958
      %s960 = scalar_lea.vmem %s182, 24
      %961 = vst [vmem:[%s960] sm:$0xff] %v959
      %s962 = scalar_lea.vmem %s173, 128
      %v963 = vld [vmem:[%s962] sm:$0xff]
      %v964 = vld [vmem:[%s962 + $0x8] sm:$0xff]
      %v965 = vld [vmem:[%s962 + $0x10] sm:$0xff]
      %v966 = vld [vmem:[%s962 + $0x18] sm:$0xff]
      %967 = vmatprep.subr.mxu0 %v251
      %968 = vmatpush1.msra.mxu0 %v250
      %969 = vmatprep.subr.mxu0 %v247
      %970 = vmatpush1.msra.mxu0 %v246
      %971 = vmatprep.subr.mxu0 %v243
      %972 = vmatpush1.msra.mxu0 %v242
      %973 = vmatprep.subr.mxu0 %v239
      %974 = vmatpush1.msra.mxu0 %v238
      %975 = vmatprep.subr.mxu0 %v235
      %976 = vmatpush1.msra.mxu0 %v234
      %977 = vmatprep.subr.mxu0 %v231
      %978 = vmatpush1.msra.mxu0 %v230
      %979 = vmatprep.subr.mxu0 %v227
      %980 = vmatpush1.msra.mxu0 %v226
      %981 = vmatprep.subr.mxu0 %v223
      %982 = vmatpush1.msra.mxu0 %v222
      %983 = vmatprep.subr.mxu0 %v219
      %984 = vmatpush1.msra.mxu0 %v218
      %985 = vmatprep.subr.mxu0 %v215
      %986 = vmatpush1.msra.mxu0 %v214
      %987 = vmatprep.subr.mxu0 %v211
      %988 = vmatpush1.msra.mxu0 %v210
      %989 = vmatprep.subr.mxu0 %v207
      %990 = vmatpush1.msra.mxu0 %v206
      %991 = vmatprep.subr.mxu0 %v203
      %992 = vmatpush1.msra.mxu0 %v202
      %993 = vmatprep.subr.mxu0 %v199
      %994 = vmatpush1.msra.mxu0 %v198
      %995 = vmatprep.subr.mxu0 %v195
      %996 = vmatpush1.msra.mxu0 %v194
      %997 = vmatprep.subr.mxu0 %v191
      %998 = vmatpush1.msra.mxu0 %v190
      %999 = vmatprep.subr.mxu0 0.0
      %1000 = vmatpush2.msra.mxu0 0.0
      %1001 = vmatprep.subr.mxu0 0.0
      %1002 = vmatpush2.msra.mxu0 0.0
      %1003 = vmatprep.subr.mxu0 0.0
      %1004 = vmatpush2.msra.mxu0 0.0
      %1005 = vmatprep.subr.mxu0 0.0
      %1006 = vmatpush2.msra.mxu0 0.0
      %1007 = vmatprep.subr.mxu0 0.0
      %1008 = vmatpush2.msra.mxu0 0.0
      %1009 = vmatprep.subr.mxu0 0.0
      %1010 = vmatpush2.msra.mxu0 0.0
      %1011 = vmatprep.subr.mxu0 0.0
      %1012 = vmatpush2.msra.mxu0 0.0
      %1013 = vmatprep.subr.mxu0 0.0
      %1014 = vmatpush2.msra.mxu0 0.0
      %1015 = vmatprep.subr.mxu0 0.0
      %1016 = vmatpush2.msra.mxu0 0.0
      %1017 = vmatprep.subr.mxu0 0.0
      %1018 = vmatpush2.msra.mxu0 0.0
      %1019 = vmatprep.subr.mxu0 0.0
      %1020 = vmatpush2.msra.mxu0 0.0
      %1021 = vmatprep.subr.mxu0 0.0
      %1022 = vmatpush2.msra.mxu0 0.0
      %1023 = vmatprep.subr.mxu0 0.0
      %1024 = vmatpush2.msra.mxu0 0.0
      %1025 = vmatprep.subr.mxu0 0.0
      %1026 = vmatpush2.msra.mxu0 0.0
      %1027 = vmatprep.subr.mxu0 0.0
      %1028 = vmatpush2.msra.mxu0 0.0
      %1029 = vmatprep.subr.mxu0 0.0
      %1030 = vmatpush2.msra.mxu0 0.0
      %1031 = vmatprep.mubr.f32.mxu0 0.0
      %1032 = vmatmul.mubr.f32.gmra.mxu0 %v959
      %v1033 = vpop.f32.mrf.mxu0
      %v1034 = vadd.f32 0.0, %v1033
      %v1035 = vpop.f32.mrf.mxu0
      %v1036 = vadd.f32 0.0, %v1035
      %1037 = vdwg.mxu0
      %1038 = vmatprep.subr.mxu0 %v253
      %1039 = vmatpush1.msra.mxu0 %v252
      %1040 = vmatprep.subr.mxu0 %v249
      %1041 = vmatpush1.msra.mxu0 %v248
      %1042 = vmatprep.subr.mxu0 %v245
      %1043 = vmatpush1.msra.mxu0 %v244
      %1044 = vmatprep.subr.mxu0 %v241
      %1045 = vmatpush1.msra.mxu0 %v240
      %1046 = vmatprep.subr.mxu0 %v237
      %1047 = vmatpush1.msra.mxu0 %v236
      %1048 = vmatprep.subr.mxu0 %v233
      %1049 = vmatpush1.msra.mxu0 %v232
      %1050 = vmatprep.subr.mxu0 %v229
      %1051 = vmatpush1.msra.mxu0 %v228
      %1052 = vmatprep.subr.mxu0 %v225
      %1053 = vmatpush1.msra.mxu0 %v224
      %1054 = vmatprep.subr.mxu0 %v221
      %1055 = vmatpush1.msra.mxu0 %v220
      %1056 = vmatprep.subr.mxu0 %v217
      %1057 = vmatpush1.msra.mxu0 %v216
      %1058 = vmatprep.subr.mxu0 %v213
      %1059 = vmatpush1.msra.mxu0 %v212
      %1060 = vmatprep.subr.mxu0 %v209
      %1061 = vmatpush1.msra.mxu0 %v208
      %1062 = vmatprep.subr.mxu0 %v205
      %1063 = vmatpush1.msra.mxu0 %v204
      %1064 = vmatprep.subr.mxu0 %v201
      %1065 = vmatpush1.msra.mxu0 %v200
      %1066 = vmatprep.subr.mxu0 %v197
      %1067 = vmatpush1.msra.mxu0 %v196
      %1068 = vmatprep.subr.mxu0 %v193
      %1069 = vmatpush1.msra.mxu0 %v192
      %1070 = vmatprep.subr.mxu0 0.0
      %1071 = vmatpush2.msra.mxu0 0.0
      %1072 = vmatprep.subr.mxu0 0.0
      %1073 = vmatpush2.msra.mxu0 0.0
      %1074 = vmatprep.subr.mxu0 0.0
      %1075 = vmatpush2.msra.mxu0 0.0
      %1076 = vmatprep.subr.mxu0 0.0
      %1077 = vmatpush2.msra.mxu0 0.0
      %1078 = vmatprep.subr.mxu0 0.0
      %1079 = vmatpush2.msra.mxu0 0.0
      %1080 = vmatprep.subr.mxu0 0.0
      %1081 = vmatpush2.msra.mxu0 0.0
      %1082 = vmatprep.subr.mxu0 0.0
      %1083 = vmatpush2.msra.mxu0 0.0
      %1084 = vmatprep.subr.mxu0 0.0
      %1085 = vmatpush2.msra.mxu0 0.0
      %1086 = vmatprep.subr.mxu0 0.0
      %1087 = vmatpush2.msra.mxu0 0.0
      %1088 = vmatprep.subr.mxu0 0.0
      %1089 = vmatpush2.msra.mxu0 0.0
      %1090 = vmatprep.subr.mxu0 0.0
      %1091 = vmatpush2.msra.mxu0 0.0
      %1092 = vmatprep.subr.mxu0 0.0
      %1093 = vmatpush2.msra.mxu0 0.0
      %1094 = vmatprep.subr.mxu0 0.0
      %1095 = vmatpush2.msra.mxu0 0.0
      %1096 = vmatprep.subr.mxu0 0.0
      %1097 = vmatpush2.msra.mxu0 0.0
      %1098 = vmatprep.subr.mxu0 0.0
      %1099 = vmatpush2.msra.mxu0 0.0
      %1100 = vmatprep.subr.mxu0 0.0
      %1101 = vmatpush2.msra.mxu0 0.0
      %1102 = vmatprep.mubr.f32.mxu0 0.0
      %1103 = vmatmul.mubr.f32.gmra.mxu0 %v959
      %v1104 = vpop.f32.mrf.mxu0
      %v1105 = vadd.f32 0.0, %v1104
      %v1106 = vpop.f32.mrf.mxu0
      %v1107 = vadd.f32 0.0, %v1106
      %1108 = vdwg.mxu0
      %v1109 = vadd.f32 %v963, %v1034
      %v1110 = vadd.f32 %v964, %v1036
      %v1111 = vadd.f32 %v965, %v1105
      %v1112 = vadd.f32 %v966, %v1107
      %v1113 = vxor.u32 %v1109, 2147483648
      %v1114 = vxor.u32 %v1110, 2147483648
      %v1115 = vxor.u32 %v1111, 2147483648
      %v1116 = vmul.f32 %v1113, 1.442695
      %v1117 = vpow.pop %v1116
      %v1118 = vmul.f32 %v1114, 1.442695
      %v1119 = vpow.pop %v1118
      %v1120 = vmul.f32 %v1115, 1.442695
      %v1121 = vpow.pop %v1120
      %v1122 = vadd.f32 %v1117, 1.0
      %v1123 = vadd.f32 %v1119, 1.0
      %v1124 = vadd.f32 %v1121, 1.0
      %v1125 = vrcp.pop %v1122
      %v1126 = vmul.f32 1.0, %v1125
      %v1127 = vrcp.pop %v1123
      %v1128 = vmul.f32 1.0, %v1127
      %v1129 = vrcp.pop %v1124
      %v1130 = vmul.f32 1.0, %v1129
      %v1131 = vtanh.pop %v1112
      %v1132 = vmul.f32 %v1128, %v957
      %v1133 = vmul.f32 %v1126, %v1131
      %v1134 = vadd.f32 %v1132, %v1133
      %v1135 = vtanh.pop %v1134
      %v1136 = vmul.f32 %v1130, %v1135
      %s1137 = scalar_lea.vmem %s182, 32
      %1138 = vst [vmem:[%s1137] sm:$0xff] %v1136
      %s1139 = scalar_lea.vmem %s173, 160
      %v1140 = vld [vmem:[%s1139] sm:$0xff]
      %v1141 = vld [vmem:[%s1139 + $0x8] sm:$0xff]
      %v1142 = vld [vmem:[%s1139 + $0x10] sm:$0xff]
      %v1143 = vld [vmem:[%s1139 + $0x18] sm:$0xff]
      %1144 = vmatprep.subr.mxu0 %v251
      %1145 = vmatpush1.msra.mxu0 %v250
      %1146 = vmatprep.subr.mxu0 %v247
      %1147 = vmatpush1.msra.mxu0 %v246
      %1148 = vmatprep.subr.mxu0 %v243
      %1149 = vmatpush1.msra.mxu0 %v242
      %1150 = vmatprep.subr.mxu0 %v239
      %1151 = vmatpush1.msra.mxu0 %v238
      %1152 = vmatprep.subr.mxu0 %v235
      %1153 = vmatpush1.msra.mxu0 %v234
      %1154 = vmatprep.subr.mxu0 %v231
      %1155 = vmatpush1.msra.mxu0 %v230
      %1156 = vmatprep.subr.mxu0 %v227
      %1157 = vmatpush1.msra.mxu0 %v226
      %1158 = vmatprep.subr.mxu0 %v223
      %1159 = vmatpush1.msra.mxu0 %v222
      %1160 = vmatprep.subr.mxu0 %v219
      %1161 = vmatpush1.msra.mxu0 %v218
      %1162 = vmatprep.subr.mxu0 %v215
      %1163 = vmatpush1.msra.mxu0 %v214
      %1164 = vmatprep.subr.mxu0 %v211
      %1165 = vmatpush1.msra.mxu0 %v210
      %1166 = vmatprep.subr.mxu0 %v207
      %1167 = vmatpush1.msra.mxu0 %v206
      %1168 = vmatprep.subr.mxu0 %v203
      %1169 = vmatpush1.msra.mxu0 %v202
      %1170 = vmatprep.subr.mxu0 %v199
      %1171 = vmatpush1.msra.mxu0 %v198
      %1172 = vmatprep.subr.mxu0 %v195
      %1173 = vmatpush1.msra.mxu0 %v194
      %1174 = vmatprep.subr.mxu0 %v191
      %1175 = vmatpush1.msra.mxu0 %v190
      %1176 = vmatprep.subr.mxu0 0.0
      %1177 = vmatpush2.msra.mxu0 0.0
      %1178 = vmatprep.subr.mxu0 0.0
      %1179 = vmatpush2.msra.mxu0 0.0
      %1180 = vmatprep.subr.mxu0 0.0
      %1181 = vmatpush2.msra.mxu0 0.0
      %1182 = vmatprep.subr.mxu0 0.0
      %1183 = vmatpush2.msra.mxu0 0.0
      %1184 = vmatprep.subr.mxu0 0.0
      %1185 = vmatpush2.msra.mxu0 0.0
      %1186 = vmatprep.subr.mxu0 0.0
      %1187 = vmatpush2.msra.mxu0 0.0
      %1188 = vmatprep.subr.mxu0 0.0
      %1189 = vmatpush2.msra.mxu0 0.0
      %1190 = vmatprep.subr.mxu0 0.0
      %1191 = vmatpush2.msra.mxu0 0.0
      %1192 = vmatprep.subr.mxu0 0.0
      %1193 = vmatpush2.msra.mxu0 0.0
      %1194 = vmatprep.subr.mxu0 0.0
      %1195 = vmatpush2.msra.mxu0 0.0
      %1196 = vmatprep.subr.mxu0 0.0
      %1197 = vmatpush2.msra.mxu0 0.0
      %1198 = vmatprep.subr.mxu0 0.0
      %1199 = vmatpush2.msra.mxu0 0.0
      %1200 = vmatprep.subr.mxu0 0.0
      %1201 = vmatpush2.msra.mxu0 0.0
      %1202 = vmatprep.subr.mxu0 0.0
      %1203 = vmatpush2.msra.mxu0 0.0
      %1204 = vmatprep.subr.mxu0 0.0
      %1205 = vmatpush2.msra.mxu0 0.0
      %1206 = vmatprep.subr.mxu0 0.0
      %1207 = vmatpush2.msra.mxu0 0.0
      %1208 = vmatprep.mubr.f32.mxu0 0.0
      %1209 = vmatmul.mubr.f32.gmra.mxu0 %v1136
      %v1210 = vpop.f32.mrf.mxu0
      %v1211 = vadd.f32 0.0, %v1210
      %v1212 = vpop.f32.mrf.mxu0
      %v1213 = vadd.f32 0.0, %v1212
      %1214 = vdwg.mxu0
      %1215 = vmatprep.subr.mxu0 %v253
      %1216 = vmatpush1.msra.mxu0 %v252
      %1217 = vmatprep.subr.mxu0 %v249
      %1218 = vmatpush1.msra.mxu0 %v248
      %1219 = vmatprep.subr.mxu0 %v245
      %1220 = vmatpush1.msra.mxu0 %v244
      %1221 = vmatprep.subr.mxu0 %v241
      %1222 = vmatpush1.msra.mxu0 %v240
      %1223 = vmatprep.subr.mxu0 %v237
      %1224 = vmatpush1.msra.mxu0 %v236
      %1225 = vmatprep.subr.mxu0 %v233
      %1226 = vmatpush1.msra.mxu0 %v232
      %1227 = vmatprep.subr.mxu0 %v229
      %1228 = vmatpush1.msra.mxu0 %v228
      %1229 = vmatprep.subr.mxu0 %v225
      %1230 = vmatpush1.msra.mxu0 %v224
      %1231 = vmatprep.subr.mxu0 %v221
      %1232 = vmatpush1.msra.mxu0 %v220
      %1233 = vmatprep.subr.mxu0 %v217
      %1234 = vmatpush1.msra.mxu0 %v216
      %1235 = vmatprep.subr.mxu0 %v213
      %1236 = vmatpush1.msra.mxu0 %v212
      %1237 = vmatprep.subr.mxu0 %v209
      %1238 = vmatpush1.msra.mxu0 %v208
      %1239 = vmatprep.subr.mxu0 %v205
      %1240 = vmatpush1.msra.mxu0 %v204
      %1241 = vmatprep.subr.mxu0 %v201
      %1242 = vmatpush1.msra.mxu0 %v200
      %1243 = vmatprep.subr.mxu0 %v197
      %1244 = vmatpush1.msra.mxu0 %v196
      %1245 = vmatprep.subr.mxu0 %v193
      %1246 = vmatpush1.msra.mxu0 %v192
      %1247 = vmatprep.subr.mxu0 0.0
      %1248 = vmatpush2.msra.mxu0 0.0
      %1249 = vmatprep.subr.mxu0 0.0
      %1250 = vmatpush2.msra.mxu0 0.0
      %1251 = vmatprep.subr.mxu0 0.0
      %1252 = vmatpush2.msra.mxu0 0.0
      %1253 = vmatprep.subr.mxu0 0.0
      %1254 = vmatpush2.msra.mxu0 0.0
      %1255 = vmatprep.subr.mxu0 0.0
      %1256 = vmatpush2.msra.mxu0 0.0
      %1257 = vmatprep.subr.mxu0 0.0
      %1258 = vmatpush2.msra.mxu0 0.0
      %1259 = vmatprep.subr.mxu0 0.0
      %1260 = vmatpush2.msra.mxu0 0.0
      %1261 = vmatprep.subr.mxu0 0.0
      %1262 = vmatpush2.msra.mxu0 0.0
      %1263 = vmatprep.subr.mxu0 0.0
      %1264 = vmatpush2.msra.mxu0 0.0
      %1265 = vmatprep.subr.mxu0 0.0
      %1266 = vmatpush2.msra.mxu0 0.0
      %1267 = vmatprep.subr.mxu0 0.0
      %1268 = vmatpush2.msra.mxu0 0.0
      %1269 = vmatprep.subr.mxu0 0.0
      %1270 = vmatpush2.msra.mxu0 0.0
      %1271 = vmatprep.subr.mxu0 0.0
      %1272 = vmatpush2.msra.mxu0 0.0
      %1273 = vmatprep.subr.mxu0 0.0
      %1274 = vmatpush2.msra.mxu0 0.0
      %1275 = vmatprep.subr.mxu0 0.0
      %1276 = vmatpush2.msra.mxu0 0.0
      %1277 = vmatprep.subr.mxu0 0.0
      %1278 = vmatpush2.msra.mxu0 0.0
      %1279 = vmatprep.mubr.f32.mxu0 0.0
      %1280 = vmatmul.mubr.f32.gmra.mxu0 %v1136
      %v1281 = vpop.f32.mrf.mxu0
      %v1282 = vadd.f32 0.0, %v1281
      %v1283 = vpop.f32.mrf.mxu0
      %v1284 = vadd.f32 0.0, %v1283
      %1285 = vdwg.mxu0
      %v1286 = vadd.f32 %v1140, %v1211
      %v1287 = vadd.f32 %v1141, %v1213
      %v1288 = vadd.f32 %v1142, %v1282
      %v1289 = vadd.f32 %v1143, %v1284
      %v1290 = vxor.u32 %v1286, 2147483648
      %v1291 = vxor.u32 %v1287, 2147483648
      %v1292 = vxor.u32 %v1288, 2147483648
      %v1293 = vmul.f32 %v1290, 1.442695
      %v1294 = vpow.pop %v1293
      %v1295 = vmul.f32 %v1291, 1.442695
      %v1296 = vpow.pop %v1295
      %v1297 = vmul.f32 %v1292, 1.442695
      %v1298 = vpow.pop %v1297
      %v1299 = vadd.f32 %v1294, 1.0
      %v1300 = vadd.f32 %v1296, 1.0
      %v1301 = vadd.f32 %v1298, 1.0
      %v1302 = vrcp.pop %v1299
      %v1303 = vmul.f32 1.0, %v1302
      %v1304 = vrcp.pop %v1300
      %v1305 = vmul.f32 1.0, %v1304
      %v1306 = vrcp.pop %v1301
      %v1307 = vmul.f32 1.0, %v1306
      %v1308 = vtanh.pop %v1289
      %v1309 = vmul.f32 %v1305, %v1134
      %v1310 = vmul.f32 %v1303, %v1308
      %v1311 = vadd.f32 %v1309, %v1310
      %v1312 = vtanh.pop %v1311
      %v1313 = vmul.f32 %v1307, %v1312
      %s1314 = scalar_lea.vmem %s182, 40
      %1315 = vst [vmem:[%s1314] sm:$0xff] %v1313
      %s1316 = scalar_lea.vmem %s173, 192
      %v1317 = vld [vmem:[%s1316] sm:$0xff]
      %v1318 = vld [vmem:[%s1316 + $0x8] sm:$0xff]
      %v1319 = vld [vmem:[%s1316 + $0x10] sm:$0xff]
      %v1320 = vld [vmem:[%s1316 + $0x18] sm:$0xff]
      %1321 = vmatprep.subr.mxu0 %v251
      %1322 = vmatpush1.msra.mxu0 %v250
      %1323 = vmatprep.subr.mxu0 %v247
      %1324 = vmatpush1.msra.mxu0 %v246
      %1325 = vmatprep.subr.mxu0 %v243
      %1326 = vmatpush1.msra.mxu0 %v242
      %1327 = vmatprep.subr.mxu0 %v239
      %1328 = vmatpush1.msra.mxu0 %v238
      %1329 = vmatprep.subr.mxu0 %v235
      %1330 = vmatpush1.msra.mxu0 %v234
      %1331 = vmatprep.subr.mxu0 %v231
      %1332 = vmatpush1.msra.mxu0 %v230
      %1333 = vmatprep.subr.mxu0 %v227
      %1334 = vmatpush1.msra.mxu0 %v226
      %1335 = vmatprep.subr.mxu0 %v223
      %1336 = vmatpush1.msra.mxu0 %v222
      %1337 = vmatprep.subr.mxu0 %v219
      %1338 = vmatpush1.msra.mxu0 %v218
      %1339 = vmatprep.subr.mxu0 %v215
      %1340 = vmatpush1.msra.mxu0 %v214
      %1341 = vmatprep.subr.mxu0 %v211
      %1342 = vmatpush1.msra.mxu0 %v210
      %1343 = vmatprep.subr.mxu0 %v207
      %1344 = vmatpush1.msra.mxu0 %v206
      %1345 = vmatprep.subr.mxu0 %v203
      %1346 = vmatpush1.msra.mxu0 %v202
      %1347 = vmatprep.subr.mxu0 %v199
      %1348 = vmatpush1.msra.mxu0 %v198
      %1349 = vmatprep.subr.mxu0 %v195
      %1350 = vmatpush1.msra.mxu0 %v194
      %1351 = vmatprep.subr.mxu0 %v191
      %1352 = vmatpush1.msra.mxu0 %v190
      %1353 = vmatprep.subr.mxu0 0.0
      %1354 = vmatpush2.msra.mxu0 0.0
      %1355 = vmatprep.subr.mxu0 0.0
      %1356 = vmatpush2.msra.mxu0 0.0
      %1357 = vmatprep.subr.mxu0 0.0
      %1358 = vmatpush2.msra.mxu0 0.0
      %1359 = vmatprep.subr.mxu0 0.0
      %1360 = vmatpush2.msra.mxu0 0.0
      %1361 = vmatprep.subr.mxu0 0.0
      %1362 = vmatpush2.msra.mxu0 0.0
      %1363 = vmatprep.subr.mxu0 0.0
      %1364 = vmatpush2.msra.mxu0 0.0
      %1365 = vmatprep.subr.mxu0 0.0
      %1366 = vmatpush2.msra.mxu0 0.0
      %1367 = vmatprep.subr.mxu0 0.0
      %1368 = vmatpush2.msra.mxu0 0.0
      %1369 = vmatprep.subr.mxu0 0.0
      %1370 = vmatpush2.msra.mxu0 0.0
      %1371 = vmatprep.subr.mxu0 0.0
      %1372 = vmatpush2.msra.mxu0 0.0
      %1373 = vmatprep.subr.mxu0 0.0
      %1374 = vmatpush2.msra.mxu0 0.0
      %1375 = vmatprep.subr.mxu0 0.0
      %1376 = vmatpush2.msra.mxu0 0.0
      %1377 = vmatprep.subr.mxu0 0.0
      %1378 = vmatpush2.msra.mxu0 0.0
      %1379 = vmatprep.subr.mxu0 0.0
      %1380 = vmatpush2.msra.mxu0 0.0
      %1381 = vmatprep.subr.mxu0 0.0
      %1382 = vmatpush2.msra.mxu0 0.0
      %1383 = vmatprep.subr.mxu0 0.0
      %1384 = vmatpush2.msra.mxu0 0.0
      %1385 = vmatprep.mubr.f32.mxu0 0.0
      %1386 = vmatmul.mubr.f32.gmra.mxu0 %v1313
      %v1387 = vpop.f32.mrf.mxu0
      %v1388 = vadd.f32 0.0, %v1387
      %v1389 = vpop.f32.mrf.mxu0
      %v1390 = vadd.f32 0.0, %v1389
      %1391 = vdwg.mxu0
      %1392 = vmatprep.subr.mxu0 %v253
      %1393 = vmatpush1.msra.mxu0 %v252
      %1394 = vmatprep.subr.mxu0 %v249
      %1395 = vmatpush1.msra.mxu0 %v248
      %1396 = vmatprep.subr.mxu0 %v245
      %1397 = vmatpush1.msra.mxu0 %v244
      %1398 = vmatprep.subr.mxu0 %v241
      %1399 = vmatpush1.msra.mxu0 %v240
      %1400 = vmatprep.subr.mxu0 %v237
      %1401 = vmatpush1.msra.mxu0 %v236
      %1402 = vmatprep.subr.mxu0 %v233
      %1403 = vmatpush1.msra.mxu0 %v232
      %1404 = vmatprep.subr.mxu0 %v229
      %1405 = vmatpush1.msra.mxu0 %v228
      %1406 = vmatprep.subr.mxu0 %v225
      %1407 = vmatpush1.msra.mxu0 %v224
      %1408 = vmatprep.subr.mxu0 %v221
      %1409 = vmatpush1.msra.mxu0 %v220
      %1410 = vmatprep.subr.mxu0 %v217
      %1411 = vmatpush1.msra.mxu0 %v216
      %1412 = vmatprep.subr.mxu0 %v213
      %1413 = vmatpush1.msra.mxu0 %v212
      %1414 = vmatprep.subr.mxu0 %v209
      %1415 = vmatpush1.msra.mxu0 %v208
      %1416 = vmatprep.subr.mxu0 %v205
      %1417 = vmatpush1.msra.mxu0 %v204
      %1418 = vmatprep.subr.mxu0 %v201
      %1419 = vmatpush1.msra.mxu0 %v200
      %1420 = vmatprep.subr.mxu0 %v197
      %1421 = vmatpush1.msra.mxu0 %v196
      %1422 = vmatprep.subr.mxu0 %v193
      %1423 = vmatpush1.msra.mxu0 %v192
      %1424 = vmatprep.subr.mxu0 0.0
      %1425 = vmatpush2.msra.mxu0 0.0
      %1426 = vmatprep.subr.mxu0 0.0
      %1427 = vmatpush2.msra.mxu0 0.0
      %1428 = vmatprep.subr.mxu0 0.0
      %1429 = vmatpush2.msra.mxu0 0.0
      %1430 = vmatprep.subr.mxu0 0.0
      %1431 = vmatpush2.msra.mxu0 0.0
      %1432 = vmatprep.subr.mxu0 0.0
      %1433 = vmatpush2.msra.mxu0 0.0
      %1434 = vmatprep.subr.mxu0 0.0
      %1435 = vmatpush2.msra.mxu0 0.0
      %1436 = vmatprep.subr.mxu0 0.0
      %1437 = vmatpush2.msra.mxu0 0.0
      %1438 = vmatprep.subr.mxu0 0.0
      %1439 = vmatpush2.msra.mxu0 0.0
      %1440 = vmatprep.subr.mxu0 0.0
      %1441 = vmatpush2.msra.mxu0 0.0
      %1442 = vmatprep.subr.mxu0 0.0
      %1443 = vmatpush2.msra.mxu0 0.0
      %1444 = vmatprep.subr.mxu0 0.0
      %1445 = vmatpush2.msra.mxu0 0.0
      %1446 = vmatprep.subr.mxu0 0.0
      %1447 = vmatpush2.msra.mxu0 0.0
      %1448 = vmatprep.subr.mxu0 0.0
      %1449 = vmatpush2.msra.mxu0 0.0
      %1450 = vmatprep.subr.mxu0 0.0
      %1451 = vmatpush2.msra.mxu0 0.0
      %1452 = vmatprep.subr.mxu0 0.0
      %1453 = vmatpush2.msra.mxu0 0.0
      %1454 = vmatprep.subr.mxu0 0.0
      %1455 = vmatpush2.msra.mxu0 0.0
      %1456 = vmatprep.mubr.f32.mxu0 0.0
      %1457 = vmatmul.mubr.f32.gmra.mxu0 %v1313
      %v1458 = vpop.f32.mrf.mxu0
      %v1459 = vadd.f32 0.0, %v1458
      %v1460 = vpop.f32.mrf.mxu0
      %v1461 = vadd.f32 0.0, %v1460
      %1462 = vdwg.mxu0
      %v1463 = vadd.f32 %v1317, %v1388
      %v1464 = vadd.f32 %v1318, %v1390
      %v1465 = vadd.f32 %v1319, %v1459
      %v1466 = vadd.f32 %v1320, %v1461
      %v1467 = vxor.u32 %v1463, 2147483648
      %v1468 = vxor.u32 %v1464, 2147483648
      %v1469 = vxor.u32 %v1465, 2147483648
      %v1470 = vmul.f32 %v1467, 1.442695
      %v1471 = vpow.pop %v1470
      %v1472 = vmul.f32 %v1468, 1.442695
      %v1473 = vpow.pop %v1472
      %v1474 = vmul.f32 %v1469, 1.442695
      %v1475 = vpow.pop %v1474
      %v1476 = vadd.f32 %v1471, 1.0
      %v1477 = vadd.f32 %v1473, 1.0
      %v1478 = vadd.f32 %v1475, 1.0
      %v1479 = vrcp.pop %v1476
      %v1480 = vmul.f32 1.0, %v1479
      %v1481 = vrcp.pop %v1477
      %v1482 = vmul.f32 1.0, %v1481
      %v1483 = vrcp.pop %v1478
      %v1484 = vmul.f32 1.0, %v1483
      %v1485 = vtanh.pop %v1466
      %v1486 = vmul.f32 %v1482, %v1311
      %v1487 = vmul.f32 %v1480, %v1485
      %v1488 = vadd.f32 %v1486, %v1487
      %v1489 = vtanh.pop %v1488
      %v1490 = vmul.f32 %v1484, %v1489
      %s1491 = scalar_lea.vmem %s182, 48
      %1492 = vst [vmem:[%s1491] sm:$0xff] %v1490
      %s1493 = scalar_lea.vmem %s173, 224
      %v1494 = vld [vmem:[%s1493] sm:$0xff]
      %v1495 = vld [vmem:[%s1493 + $0x8] sm:$0xff]
      %v1496 = vld [vmem:[%s1493 + $0x10] sm:$0xff]
      %v1497 = vld [vmem:[%s1493 + $0x18] sm:$0xff]
      %1498 = vmatprep.subr.mxu0 %v251
      %1499 = vmatpush1.msra.mxu0 %v250
      %1500 = vmatprep.subr.mxu0 %v247
      %1501 = vmatpush1.msra.mxu0 %v246
      %1502 = vmatprep.subr.mxu0 %v243
      %1503 = vmatpush1.msra.mxu0 %v242
      %1504 = vmatprep.subr.mxu0 %v239
      %1505 = vmatpush1.msra.mxu0 %v238
      %1506 = vmatprep.subr.mxu0 %v235
      %1507 = vmatpush1.msra.mxu0 %v234
      %1508 = vmatprep.subr.mxu0 %v231
      %1509 = vmatpush1.msra.mxu0 %v230
      %1510 = vmatprep.subr.mxu0 %v227
      %1511 = vmatpush1.msra.mxu0 %v226
      %1512 = vmatprep.subr.mxu0 %v223
      %1513 = vmatpush1.msra.mxu0 %v222
      %1514 = vmatprep.subr.mxu0 %v219
      %1515 = vmatpush1.msra.mxu0 %v218
      %1516 = vmatprep.subr.mxu0 %v215
      %1517 = vmatpush1.msra.mxu0 %v214
      %1518 = vmatprep.subr.mxu0 %v211
      %1519 = vmatpush1.msra.mxu0 %v210
      %1520 = vmatprep.subr.mxu0 %v207
      %1521 = vmatpush1.msra.mxu0 %v206
      %1522 = vmatprep.subr.mxu0 %v203
      %1523 = vmatpush1.msra.mxu0 %v202
      %1524 = vmatprep.subr.mxu0 %v199
      %1525 = vmatpush1.msra.mxu0 %v198
      %1526 = vmatprep.subr.mxu0 %v195
      %1527 = vmatpush1.msra.mxu0 %v194
      %1528 = vmatprep.subr.mxu0 %v191
      %1529 = vmatpush1.msra.mxu0 %v190
      %1530 = vmatprep.subr.mxu0 0.0
      %1531 = vmatpush2.msra.mxu0 0.0
      %1532 = vmatprep.subr.mxu0 0.0
      %1533 = vmatpush2.msra.mxu0 0.0
      %1534 = vmatprep.subr.mxu0 0.0
      %1535 = vmatpush2.msra.mxu0 0.0
      %1536 = vmatprep.subr.mxu0 0.0
      %1537 = vmatpush2.msra.mxu0 0.0
      %1538 = vmatprep.subr.mxu0 0.0
      %1539 = vmatpush2.msra.mxu0 0.0
      %1540 = vmatprep.subr.mxu0 0.0
      %1541 = vmatpush2.msra.mxu0 0.0
      %1542 = vmatprep.subr.mxu0 0.0
      %1543 = vmatpush2.msra.mxu0 0.0
      %1544 = vmatprep.subr.mxu0 0.0
      %1545 = vmatpush2.msra.mxu0 0.0
      %1546 = vmatprep.subr.mxu0 0.0
      %1547 = vmatpush2.msra.mxu0 0.0
      %1548 = vmatprep.subr.mxu0 0.0
      %1549 = vmatpush2.msra.mxu0 0.0
      %1550 = vmatprep.subr.mxu0 0.0
      %1551 = vmatpush2.msra.mxu0 0.0
      %1552 = vmatprep.subr.mxu0 0.0
      %1553 = vmatpush2.msra.mxu0 0.0
      %1554 = vmatprep.subr.mxu0 0.0
      %1555 = vmatpush2.msra.mxu0 0.0
      %1556 = vmatprep.subr.mxu0 0.0
      %1557 = vmatpush2.msra.mxu0 0.0
      %1558 = vmatprep.subr.mxu0 0.0
      %1559 = vmatpush2.msra.mxu0 0.0
      %1560 = vmatprep.subr.mxu0 0.0
      %1561 = vmatpush2.msra.mxu0 0.0
      %1562 = vmatprep.mubr.f32.mxu0 0.0
      %1563 = vmatmul.mubr.f32.gmra.mxu0 %v1490
      %v1564 = vpop.f32.mrf.mxu0
      %v1565 = vadd.f32 0.0, %v1564
      %v1566 = vpop.f32.mrf.mxu0
      %v1567 = vadd.f32 0.0, %v1566
      %1568 = vdwg.mxu0
      %1569 = vmatprep.subr.mxu0 %v253
      %1570 = vmatpush1.msra.mxu0 %v252
      %1571 = vmatprep.subr.mxu0 %v249
      %1572 = vmatpush1.msra.mxu0 %v248
      %1573 = vmatprep.subr.mxu0 %v245
      %1574 = vmatpush1.msra.mxu0 %v244
      %1575 = vmatprep.subr.mxu0 %v241
      %1576 = vmatpush1.msra.mxu0 %v240
      %1577 = vmatprep.subr.mxu0 %v237
      %1578 = vmatpush1.msra.mxu0 %v236
      %1579 = vmatprep.subr.mxu0 %v233
      %1580 = vmatpush1.msra.mxu0 %v232
      %1581 = vmatprep.subr.mxu0 %v229
      %1582 = vmatpush1.msra.mxu0 %v228
      %1583 = vmatprep.subr.mxu0 %v225
      %1584 = vmatpush1.msra.mxu0 %v224
      %1585 = vmatprep.subr.mxu0 %v221
      %1586 = vmatpush1.msra.mxu0 %v220
      %1587 = vmatprep.subr.mxu0 %v217
      %1588 = vmatpush1.msra.mxu0 %v216
      %1589 = vmatprep.subr.mxu0 %v213
      %1590 = vmatpush1.msra.mxu0 %v212
      %1591 = vmatprep.subr.mxu0 %v209
      %1592 = vmatpush1.msra.mxu0 %v208
      %1593 = vmatprep.subr.mxu0 %v205
      %1594 = vmatpush1.msra.mxu0 %v204
      %1595 = vmatprep.subr.mxu0 %v201
      %1596 = vmatpush1.msra.mxu0 %v200
      %1597 = vmatprep.subr.mxu0 %v197
      %1598 = vmatpush1.msra.mxu0 %v196
      %1599 = vmatprep.subr.mxu0 %v193
      %1600 = vmatpush1.msra.mxu0 %v192
      %1601 = vmatprep.subr.mxu0 0.0
      %1602 = vmatpush2.msra.mxu0 0.0
      %1603 = vmatprep.subr.mxu0 0.0
      %1604 = vmatpush2.msra.mxu0 0.0
      %1605 = vmatprep.subr.mxu0 0.0
      %1606 = vmatpush2.msra.mxu0 0.0
      %1607 = vmatprep.subr.mxu0 0.0
      %1608 = vmatpush2.msra.mxu0 0.0
      %1609 = vmatprep.subr.mxu0 0.0
      %1610 = vmatpush2.msra.mxu0 0.0
      %1611 = vmatprep.subr.mxu0 0.0
      %1612 = vmatpush2.msra.mxu0 0.0
      %1613 = vmatprep.subr.mxu0 0.0
      %1614 = vmatpush2.msra.mxu0 0.0
      %1615 = vmatprep.subr.mxu0 0.0
      %1616 = vmatpush2.msra.mxu0 0.0
      %1617 = vmatprep.subr.mxu0 0.0
      %1618 = vmatpush2.msra.mxu0 0.0
      %1619 = vmatprep.subr.mxu0 0.0
      %1620 = vmatpush2.msra.mxu0 0.0
      %1621 = vmatprep.subr.mxu0 0.0
      %1622 = vmatpush2.msra.mxu0 0.0
      %1623 = vmatprep.subr.mxu0 0.0
      %1624 = vmatpush2.msra.mxu0 0.0
      %1625 = vmatprep.subr.mxu0 0.0
      %1626 = vmatpush2.msra.mxu0 0.0
      %1627 = vmatprep.subr.mxu0 0.0
      %1628 = vmatpush2.msra.mxu0 0.0
      %1629 = vmatprep.subr.mxu0 0.0
      %1630 = vmatpush2.msra.mxu0 0.0
      %1631 = vmatprep.subr.mxu0 0.0
      %1632 = vmatpush2.msra.mxu0 0.0
      %1633 = vmatprep.mubr.f32.mxu0 0.0
      %1634 = vmatmul.mubr.f32.gmra.mxu0 %v1490
      %v1635 = vpop.f32.mrf.mxu0
      %v1636 = vadd.f32 0.0, %v1635
      %v1637 = vpop.f32.mrf.mxu0
      %v1638 = vadd.f32 0.0, %v1637
      %1639 = vdwg.mxu0
      %v1640 = vadd.f32 %v1494, %v1565
      %v1641 = vadd.f32 %v1495, %v1567
      %v1642 = vadd.f32 %v1496, %v1636
      %v1643 = vadd.f32 %v1497, %v1638
      %v1644 = vxor.u32 %v1640, 2147483648
      %v1645 = vxor.u32 %v1641, 2147483648
      %v1646 = vxor.u32 %v1642, 2147483648
      %v1647 = vmul.f32 %v1644, 1.442695
      %v1648 = vpow.pop %v1647
      %v1649 = vmul.f32 %v1645, 1.442695
      %v1650 = vpow.pop %v1649
      %v1651 = vmul.f32 %v1646, 1.442695
      %v1652 = vpow.pop %v1651
      %v1653 = vadd.f32 %v1648, 1.0
      %v1654 = vadd.f32 %v1650, 1.0
      %v1655 = vadd.f32 %v1652, 1.0
      %v1656 = vrcp.pop %v1653
      %v1657 = vmul.f32 1.0, %v1656
      %v1658 = vrcp.pop %v1654
      %v1659 = vmul.f32 1.0, %v1658
      %v1660 = vrcp.pop %v1655
      %v1661 = vmul.f32 1.0, %v1660
      %v1662 = vtanh.pop %v1643
      %v1663 = vmul.f32 %v1659, %v1488
      %v1664 = vmul.f32 %v1657, %v1662
      %v1665 = vadd.f32 %v1663, %v1664
      %v1666 = vtanh.pop %v1665
      %v1667 = vmul.f32 %v1661, %v1666
      %s1668 = scalar_lea.vmem %s182, 56
      %1669 = vst [vmem:[%s1668] sm:$0xff] %v1667
      %1670 = vst [vmem:[#allocation2] sm:$0xff] %v1667
      %1671 = vst [vmem:[#allocation3] sm:$0xff] %v1665
      %s1672 = smul.u32 8, %s18
      %p1673 = scmp.lt.s32.totalorder %s1672, 23
      %s1674 = scalar_select %p1673, %s1672, 23
      %p1675 = scmp.lt.s32.totalorder %s17, 0
      %s1676 = scalar_select %p1675, %s17, 0
      %s1677 = sadd.s32 %s1676, %s1674
      %s1678 = smul.addr %s1677, 8
      %s1679 = scalar_lea.vmem %s2, %s1678
      // Predicated region
      $region33: #{lstm_forward.1} parent=27 // pred_check
        %p1680 = pneg %p94
      $region34: #{lstm_forward.1} parent=27 // pred_check_branch
        %1682 = sbr.rel (%p1680) target = $region36
      $region35: #{lstm_forward.1} parent=27 // pred_region
        %s1683 = smul.u32 8, %s18
      $region36: #{lstm_forward.1} parent=27 // pred_fallthru
        _
    $region28: #{lstm_forward.1} parent=5 // pred_fallthru
      _
    %p1684 = scmp.le.s32.totalorder 2, %s8
    // Predicated region
    $region37: #{lstm_forward.1} parent=5 // pred_check
      %p1685 = pneg %p1684
    $region38: #{lstm_forward.1} parent=5 // pred_check_branch
      %1687 = sbr.rel (%p1685) target = $region40
    $region39: #{lstm_forward.1} parent=5 // pred_region
      %s1688 = ssub.s32 %s8, 2
      // Predicated region
      $region41: #{lstm_forward.1} parent=39 // pred_check
        %p1689 = pneg %p100
      $region42: #{lstm_forward.1} parent=39 // pred_check_branch
        %1691 = sbr.rel (%p1689) target = $region44
      $region43: #{lstm_forward.1} parent=39 // pred_region
        %s1692 = smul.u32 8, %s20
        %p1693 = scmp.lt.s32.totalorder %s1692, 23
        %s1694 = scalar_select %p1693, %s1692, 23
        %p1695 = scmp.lt.s32.totalorder %s19, 0
        %s1696 = scalar_select %p1695, %s19, 0
        %s1697 = sadd.s32 %s1696, %s1694
        %s1698 = smul.addr %s1697, 8
        %s1699 = scalar_lea.vmem %s2, %s1698
      $region44: #{lstm_forward.1} parent=39 // pred_fallthru
        _
    $region40: #{lstm_forward.1} parent=5 // pred_fallthru
      _
  $region6: #{lstm_forward.1} parent=0 // loop_footer
    %s12 = sadd.s32 1, %s8
  $region7: #{lstm_forward.1} parent=0 // loop_footer_branch
    %7 = sbr.rel target = $region3
  $region8: #{lstm_forward.1} parent=0 // loop_exit
    _

</llo_original>
